<compile_context>
chip_gen: v5e
topology: v5e:2x2
jax: 0.10.0
libtpu: 0.0.40
codegen_flags: <defaults>
</compile_context>

<pallas_src>
import functools
import math

import jax
import jax.numpy as jnp
import numpy as np
from jax import lax
from jax.experimental import pallas as pl
from jax.experimental.pallas import tpu as pltpu

LOG_2PI = math.log(2.0 * math.pi)
_VMEM_LIMIT = 32 * 1024 * 1024


# ---------------------------------------------------------------------------
# helpers
# ---------------------------------------------------------------------------
def _round_up(x, m):
    return ((x + m - 1) // m) * m


def _col_stride(d):
    """Lane-aligned column stride used to lay out packed head outputs."""
    return _round_up(max(d, 1), 128)


def _pick_chunk(seq):
    """Timesteps processed per LSTM grid step."""
    return seq if seq <= 16 else 16


def _pick_rows(n):
    """Token rows per grid step for the heads kernel.

    Guarantees >= 2 grid steps whenever n >= 16 so the 'parallel' grid axis
    can shard across both TensorCores on v7x; inputs are padded to a multiple
    of the returned value (no whole-array fallback).
    """
    if n <= 8:
        return 8
    if n >= 512:
        return 256
    return max(8, (n // 2) // 8 * 8)


def _pad_axis(x, size, axis):
    pad = size - x.shape[axis]
    if pad <= 0:
        return x
    widths = [(0, 0)] * x.ndim
    widths[axis] = (0, pad)
    return jnp.pad(x, widths)


def _permute_gates(w):
    """PyTorch LSTM gate order (i,f,g,o) -> (i,f,o,g) along the last dim."""
    H = w.shape[-1] // 4
    return jnp.concatenate([w[:, :2 * H], w[:, 3 * H:], w[:, 2 * H:3 * H]],
                           axis=-1)


# ---------------------------------------------------------------------------
# Kernel 1: single LSTM layer recurrence (gate order i,f,o,g after host perm)
# ---------------------------------------------------------------------------
def _lstm_kernel(xp_ref, whh_ref, out_ref, h_scr, c_scr, *, chunk, bs, hidden):
    @pl.when(pl.program_id(0) == 0)
    def _():
        h_scr[...] = jnp.zeros_like(h_scr)
        c_scr[...] = jnp.zeros_like(c_scr)

    whh = whh_ref[...]                                  # load once per chunk

    def step(t, carry):
        h, c = carry
        r0 = pl.multiple_of(t * bs, bs)                 # sublane-aligned (bs%8==0)
        gates = xp_ref[pl.ds(r0, bs), :] + jnp.dot(
            h.astype(whh.dtype), whh, preferred_element_type=jnp.float32)
        ifo = jax.nn.sigmoid(gates[:, :3 * hidden])     # one sigmoid over 3H
        g = jnp.tanh(gates[:, 3 * hidden:])
        i = ifo[:, :hidden]
        f = ifo[:, hidden:2 * hidden]
        o = ifo[:, 2 * hidden:]
        c = f * c + i * g
        h = o * jnp.tanh(c)
        out_ref[pl.ds(r0, bs), :] = h                   # sublane-aligned store
        return (h, c)

    h, c = lax.fori_loop(0, chunk, step, (h_scr[...], c_scr[...]), unroll=True)
    h_scr[...] = h
    c_scr[...] = c


def lstm_layer(xp2d, whh, *, seq_pad, bs_pad, chunk, hidden):
    """One LSTM layer recurrence. xp2d: (seq_pad*bs_pad, 4H) pre-projected."""
    rows = chunk * bs_pad
    kernel = functools.partial(_lstm_kernel, chunk=chunk, bs=bs_pad,
                               hidden=hidden)
    cost = pl.CostEstimate(
        flops=2 * seq_pad * bs_pad * hidden * 4 * hidden,
        transcendentals=5 * seq_pad * bs_pad * hidden,
        bytes_accessed=4 * (seq_pad * bs_pad * 5 * hidden
                            + hidden * 4 * hidden))
    return pl.pallas_call(
        kernel,
        out_shape=jax.ShapeDtypeStruct((seq_pad * bs_pad, hidden), jnp.float32),
        grid_spec=pltpu.PrefetchScalarGridSpec(
            num_scalar_prefetch=0,
            grid=(seq_pad // chunk,),
            in_specs=[
                pl.BlockSpec((rows, 4 * hidden), lambda s: (s, 0)),
                pl.BlockSpec((hidden, 4 * hidden), lambda s: (0, 0)),
            ],
            out_specs=pl.BlockSpec((rows, hidden), lambda s: (s, 0)),
            scratch_shapes=[pltpu.VMEM((bs_pad, hidden), jnp.float32),
                            pltpu.VMEM((bs_pad, hidden), jnp.float32)],
        ),
        compiler_params=pltpu.CompilerParams(
            dimension_semantics=("arbitrary",),
            vmem_limit_bytes=_VMEM_LIMIT),
        cost_estimate=cost,
    )(xp2d, whh)


# ---------------------------------------------------------------------------
# Kernel 2: fused decoder heads + diagonal-Gaussian sampling / log-prob
# ---------------------------------------------------------------------------
def _heads_kernel(lat_ref, obs_ref, gn_ref, an_ref,
                  glW1l_ref, glW1o_ref, glb1_ref, glW2_ref, glb2_ref,
                  avW1g_ref, avW1o_ref, avb1_ref, W2av_ref, b2av_ref,
                  out_ref, *, goal_dim, action_dim, gstride, astride,
                  out_cols):
    def mm(a, w_ref):
        w = w_ref[...]
        return jnp.dot(a.astype(w.dtype), w, preferred_element_type=jnp.float32)

    G, A = goal_dim, action_dim
    lat = lat_ref[...]                          # (tn, latent_dim)
    obs = obs_ref[...]                          # (tn, obs_dim)

    # --- fused goal + lp decoders (shared `lat` input); first layers
    #     concatenated along the hidden dim, second layers block-diagonal,
    #     outputs at lane-aligned columns ---
    glh = jnp.maximum(mm(lat, glW1l_ref) + mm(obs, glW1o_ref)
                      + glb1_ref[...], 0.0)
    glraw = mm(glh, glW2_ref) + glb2_ref[...]
    goal_means = 100.0 * jnp.tanh(glraw[:, 0:G] * 0.001)
    goal_stds = jnp.tanh(glraw[:, gstride:gstride + G])
    goal_var = goal_stds * goal_stds + 0.01
    goals = goal_means + jnp.sqrt(goal_var) * gn_ref[...]
    dg = goals - goal_means
    lpg = (-0.5 * jnp.sum(dg * dg / goal_var, axis=-1, keepdims=True)
           - 0.5 * jnp.sum(jnp.log(goal_var), axis=-1, keepdims=True)
           - 0.5 * G * LOG_2PI)
    lp_values = glraw[:, 2 * gstride:2 * gstride + 1]

    # --- fused action + value decoders (shared (goals, obs) input) ---
    avh = jnp.maximum(mm(goals, avW1g_ref) + mm(obs, avW1o_ref)
                      + avb1_ref[...], 0.0)                   # (tn, 2048)
    avraw = mm(avh, W2av_ref) + b2av_ref[...]
    action_means = avraw[:, 0:A]
    action_stds = avraw[:, astride:astride + A]
    action_var = 10.0 * action_stds * action_stds + 0.001
    actions = action_means + jnp.sqrt(action_var) * an_ref[...]
    da = actions - action_means
    lpa = (-0.5 * jnp.sum(da * da / action_var, axis=-1, keepdims=True)
           - 0.5 * jnp.sum(jnp.log(action_var), axis=-1, keepdims=True)
           - 0.5 * A * LOG_2PI)
    values = avraw[:, 2 * astride:2 * astride + 1]

    # --- pack all six heads into one lane-dense output slab ---
    used = A + G + 4
    pad = out_cols - used
    out_ref[...] = jnp.concatenate(
        [actions, goals, lpa, lpg, values, lp_values,
         jnp.zeros((actions.shape[0], pad), jnp.float32)], axis=-1)


def heads_call(lat2d, obs2d, gnoise, anoise, hp, *, goal_dim, action_dim):
    n, latent_dim = lat2d.shape
    obs_dim = obs2d.shape[1]
    tn = _pick_rows(n)
    n_pad = _round_up(n, tn)
    lat_p = _pad_axis(lat2d, n_pad, 0)
    obs_p = _pad_axis(obs2d, n_pad, 0)
    gn_p = _pad_axis(gnoise, n_pad, 0)
    an_p = _pad_axis(anoise, n_pad, 0)

    used = action_dim + goal_dim + 4
    out_cols = _round_up(used, 128)
    kernel = functools.partial(
        _heads_kernel, goal_dim=goal_dim, action_dim=action_dim,
        gstride=_col_stride(goal_dim), astride=_col_stride(action_dim),
        out_cols=out_cols)

    def row_spec(d):
        return pl.BlockSpec((tn, d), lambda i: (i, 0))

    weights = (hp["glW1l"], hp["glW1o"], hp["glb1"], hp["glW2"], hp["glb2"],
               hp["avW1g"], hp["avW1o"], hp["avb1"], hp["W2av"], hp["b2av"])
    w_specs = [pl.BlockSpec(w.shape, lambda i: (0, 0)) for w in weights]
    in_specs = [row_spec(latent_dim), row_spec(obs_dim),
                row_spec(goal_dim), row_spec(action_dim)] + w_specs

    mm_w = (hp["glW1l"], hp["glW1o"], hp["glW2"],
            hp["avW1g"], hp["avW1o"], hp["W2av"])
    weight_elems = sum(int(np.prod(w.shape)) for w in weights)
    cost = pl.CostEstimate(
        flops=2 * n_pad * sum(int(np.prod(w.shape)) for w in mm_w),
        transcendentals=6 * n_pad * (goal_dim + action_dim),
        bytes_accessed=4 * (n_pad * (latent_dim + obs_dim + goal_dim
                                     + action_dim + out_cols) + weight_elems))

    packed = pl.pallas_call(
        kernel,
        out_shape=jax.ShapeDtypeStruct((n_pad, out_cols), jnp.float32),
        grid_spec=pltpu.PrefetchScalarGridSpec(
            num_scalar_prefetch=0,
            grid=(n_pad // tn,),
            in_specs=in_specs,
            out_specs=pl.BlockSpec((tn, out_cols), lambda i: (i, 0)),
        ),
        compiler_params=pltpu.CompilerParams(
            dimension_semantics=("parallel",),
            vmem_limit_bytes=_VMEM_LIMIT),
        cost_estimate=cost,
    )(lat_p, obs_p, gn_p, an_p, *weights)

    A, G = action_dim, goal_dim
    packed = packed[:n]
    actions = packed[:, 0:A]
    goals = packed[:, A:A + G]
    lpa = packed[:, A + G]
    lpg = packed[:, A + G + 1]
    values = packed[:, A + G + 2:A + G + 3]
    lpv = packed[:, A + G + 3:A + G + 4]
    return actions, lpa, goals, lpg, values, lpv


def prepare_head_params(p, *, n_hidden, goal_dim, action_dim, latent_dim,
                        compute_dtype=jnp.float32):
    """Host-side weight preprocessing (done once at load time)."""
    G, A = goal_dim, action_dim
    ghid = p["gW1"].shape[1]
    lhid = p["lW1"].shape[1]
    av_hidden = p["aW1"].shape[1]                 # 1024
    obs_dim = p["aW1"].shape[0] - G
    ghid_pad = _round_up(ghid, 128)
    lhid_pad = _round_up(lhid, 128)
    GLH = ghid_pad + lhid_pad

    # fused goal+lp first layer, split by input rows (latent vs obs); the goal
    # block is zero-padded to the full latent width (no unaligned lat[:, :n_hidden]
    # slice in-kernel) and the goal decoder never sees obs (zero block).
    glW1l = jnp.zeros((latent_dim, GLH), jnp.float32)
    glW1l = glW1l.at[:n_hidden, :ghid].set(p["gW1"])
    glW1l = glW1l.at[:, ghid_pad:ghid_pad + lhid].set(p["lW1"][:latent_dim, :])
    glW1o = jnp.zeros((obs_dim, GLH), jnp.float32)
    glW1o = glW1o.at[:, ghid_pad:ghid_pad + lhid].set(p["lW1"][latent_dim:, :])
    glb1 = jnp.zeros((1, GLH), jnp.float32)
    glb1 = glb1.at[:, :ghid].set(p["gb1"])
    glb1 = glb1.at[:, ghid_pad:ghid_pad + lhid].set(p["lb1"])

    # block-diagonal second layer with lane-aligned output columns:
    # goal means [0:G], goal stds [gs:gs+G], lp value [2*gs:2*gs+1]
    gs = _col_stride(G)
    glW2 = jnp.zeros((GLH, 3 * gs), jnp.float32)
    glW2 = glW2.at[:ghid, 0:G].set(p["gW2"][:, :G])
    glW2 = glW2.at[:ghid, gs:gs + G].set(p["gW2"][:, G:2 * G])
    glW2 = glW2.at[ghid_pad:ghid_pad + lhid, 2 * gs:2 * gs + 1].set(p["lW2"])
    glb2 = jnp.zeros((1, 3 * gs), jnp.float32)
    glb2 = glb2.at[:, 0:G].set(p["gb2"][:, :G])
    glb2 = glb2.at[:, gs:gs + G].set(p["gb2"][:, G:2 * G])
    glb2 = glb2.at[:, 2 * gs:2 * gs + 1].set(p["lb2"])

    # fused action/value first layers (shared input), split by input rows
    avW1 = jnp.concatenate([p["aW1"], p["vW1"]], axis=1)       # (G+obs, 2048)
    avW1g = avW1[:G, :]
    avW1o = avW1[G:, :]
    avb1 = jnp.concatenate([p["ab1"], p["vb1"]], axis=1)
    # block-diagonal second layer with lane-aligned output columns:
    # action means [0:A], action stds [as:as+A], value [2*as:2*as+1]
    ast = _col_stride(A)
    W2av = jnp.zeros((2 * av_hidden, 3 * ast), jnp.float32)
    W2av = W2av.at[:av_hidden, 0:A].set(p["aW2"][:, :A])
    W2av = W2av.at[:av_hidden, ast:ast + A].set(p["aW2"][:, A:2 * A])
    W2av = W2av.at[av_hidden:, 2 * ast:2 * ast + 1].set(p["vW2"])
    b2av = jnp.zeros((1, 3 * ast), jnp.float32)
    b2av = b2av.at[:, 0:A].set(p["ab2"][:, :A])
    b2av = b2av.at[:, ast:ast + A].set(p["ab2"][:, A:2 * A])
    b2av = b2av.at[:, 2 * ast:2 * ast + 1].set(p["vb2"])

    cdt = compute_dtype
    return {"glW1l": glW1l.astype(cdt), "glW1o": glW1o.astype(cdt),
            "glb1": glb1, "glW2": glW2.astype(cdt), "glb2": glb2,
            "avW1g": avW1g.astype(cdt), "avW1o": avW1o.astype(cdt),
            "avb1": avb1, "W2av": W2av.astype(cdt), "b2av": b2av}


# ---------------------------------------------------------------------------
# Parameter init (deterministic, synthetic — mirrors module __init__ shapes)
# ---------------------------------------------------------------------------
def init_params(key, nl, obs_dim, goal_dim, action_dim,
                n_hidden=64, n_hidden2=64):
    H = n_hidden + n_hidden2

    def dense(k, fan_in, fan_out):
        k1, k2 = jax.random.split(k)
        s = 1.0 / math.sqrt(fan_in)
        w = jax.random.uniform(k1, (fan_in, fan_out), jnp.float32, -s, s)
        b = jax.random.uniform(k2, (1, fan_out), jnp.float32, -s, s)
        return w, b

    keys = iter(jax.random.split(key, 4 * nl + 16))
    params = {"lstm": []}
    in_dim = obs_dim + 1
    for _ in range(nl):
        wih, bih = dense(next(keys), in_dim, 4 * H)
        whh, bhh = dense(next(keys), H, 4 * H)
        params["lstm"].append((wih, whh, bih, bhh))
        in_dim = H

    gh = max(n_hidden, 2 * goal_dim)                 # goal_decoder hidden
    params["gW1"], params["gb1"] = dense(next(keys), n_hidden, gh)
    params["gW2"], params["gb2"] = dense(next(keys), gh, 2 * goal_dim)

    params["aW1"], params["ab1"] = dense(next(keys), goal_dim + obs_dim, 1024)
    params["aW2"], params["ab2"] = dense(next(keys), 1024, 2 * action_dim)

    params["vW1"], params["vb1"] = dense(next(keys), goal_dim + obs_dim, 1024)
    params["vW2"], params["vb2"] = dense(next(keys), 1024, 1)

    lh = max(H + obs_dim, 1)                         # lp_decoder hidden
    params["lW1"], params["lb1"] = dense(next(keys), H + obs_dim, lh)
    params["lW2"], params["lb2"] = dense(next(keys), lh, 1)
    return params


# ---------------------------------------------------------------------------
# Full GOALRNN forward (fresh zero hidden state, as in init_hidden)
# ---------------------------------------------------------------------------
def goalrnn_forward(params, observations, lps, noise_key, *,
                    n_hidden, goal_dim, action_dim,
                    compute_dtype=jnp.float32):
    seq, bs, obs_dim = observations.shape
    chunk = _pick_chunk(seq)
    seq_pad = _round_up(seq, chunk)
    bs_pad = _round_up(bs, 8)
    cdt = compute_dtype

    x = jnp.concatenate([observations, lps], axis=2)        # (seq, bs, obs+1)
    x = _pad_axis(_pad_axis(x, seq_pad, 0), bs_pad, 1)      # zero-pad seq/bs
    x2d = x.reshape(seq_pad * bs_pad, obs_dim + 1)

    for (wih, whh, bih, bhh) in params["lstm"]:
        hidden = whh.shape[0]
        wih_p = _permute_gates(wih)
        whh_p = _permute_gates(whh)
        bias_p = _permute_gates(bih + bhh)
        # Hoisted input projection: one full-size XLA matmul over all rows,
        # bias folded once; only the serial h @ Whh recurrence stays in-kernel.
        xp = jnp.dot(x2d.astype(cdt), wih_p.astype(cdt),
                     preferred_element_type=jnp.float32) + bias_p
        x2d = lstm_layer(xp, whh_p.astype(cdt), seq_pad=seq_pad,
                         bs_pad=bs_pad, chunk=chunk, hidden=hidden)

    latent_dim = x2d.shape[1]
    lat_full = x2d.reshape(seq_pad, bs_pad, latent_dim)[:seq, :bs]  # un-pad

    n = seq * bs
    lat2d = lat_full.reshape(n, latent_dim)
    obs2d = observations.reshape(n, obs_dim)
    kg, ka = jax.random.split(noise_key)
    gnoise = jax.random.normal(kg, (n, goal_dim), jnp.float32)
    anoise = jax.random.normal(ka, (n, action_dim), jnp.float32)

    hp = prepare_head_params(params, n_hidden=n_hidden, goal_dim=goal_dim,
                             action_dim=action_dim, latent_dim=latent_dim,
                             compute_dtype=cdt)
    actions, lpa, goals, lpg, values, lpv = heads_call(
        lat2d, obs2d, gnoise, anoise, hp,
        goal_dim=goal_dim, action_dim=action_dim)

    return (actions.reshape(seq, bs, action_dim),
            lpa.reshape(seq, bs),
            goals.reshape(seq, bs, goal_dim),
            lpg.reshape(seq, bs),
            values.reshape(seq, bs, 1),
            lpv.reshape(seq, bs, 1),
            gnoise, anoise,
            lat_full)


# ---------------------------------------------------------------------------
# Pure-JAX reference (unfused original weights) for a sanity check
# ---------------------------------------------------------------------------
def reference_forward(params, observations, lps, gnoise, anoise, *,
                      n_hidden, goal_dim, action_dim):
    seq, bs, obs_dim = observations.shape
    x = jnp.concatenate([observations, lps], axis=2)
    for (wih, whh, bih, bhh) in params["lstm"]:
        H = whh.shape[0]
        h = jnp.zeros((bs, H), jnp.float32)
        c = jnp.zeros((bs, H), jnp.float32)
        outs = []
        for t in range(seq):
            g = x[t] @ wih + h @ whh + bih + bhh
            i = jax.nn.sigmoid(g[:, 0 * H:1 * H])
            f = jax.nn.sigmoid(g[:, 1 * H:2 * H])
            gg = jnp.tanh(g[:, 2 * H:3 * H])
            o = jax.nn.sigmoid(g[:, 3 * H:4 * H])
            c = f * c + i * gg
            h = o * jnp.tanh(c)
            outs.append(h)
        x = jnp.stack(outs, axis=0)
    lat_full = x.reshape(seq * bs, -1)
    obs2d = observations.reshape(seq * bs, obs_dim)
    lat = lat_full[:, :n_hidden]

    def mlp(a, w1, b1, w2, b2):
        return jnp.maximum(a @ w1 + b1, 0.0) @ w2 + b2

    graw = mlp(lat, params["gW1"], params["gb1"], params["gW2"], params["gb2"])
    gm = 100.0 * jnp.tanh(graw[:, :goal_dim] * 0.001)
    gs = jnp.tanh(graw[:, goal_dim:])
    gv = gs * gs + 0.01
    goals = gm + jnp.sqrt(gv) * gnoise
    lpg = (-0.5 * jnp.sum((goals - gm) ** 2 / gv, -1)
           - 0.5 * jnp.sum(jnp.log(gv), -1) - 0.5 * goal_dim * LOG_2PI)

    go = jnp.concatenate([goals, obs2d], axis=-1)
    araw = mlp(go, params["aW1"], params["ab1"], params["aW2"], params["ab2"])
    am, asd = araw[:, :action_dim], araw[:, action_dim:]
    av = 10.0 * asd * asd + 0.001
    actions = am + jnp.sqrt(av) * anoise
    lpa = (-0.5 * jnp.sum((actions - am) ** 2 / av, -1)
           - 0.5 * jnp.sum(jnp.log(av), -1) - 0.5 * action_dim * LOG_2PI)

    values = mlp(go, params["vW1"], params["vb1"], params["vW2"], params["vb2"])
    lo = jnp.concatenate([lat_full, obs2d], axis=-1)
    lpv = mlp(lo, params["lW1"], params["lb1"], params["lW2"], params["lb2"])
    return (actions.reshape(seq, bs, action_dim), lpa.reshape(seq, bs),
            goals.reshape(seq, bs, goal_dim), lpg.reshape(seq, bs),
            values.reshape(seq, bs, 1), lpv.reshape(seq, bs, 1))


if __name__ == "__main__":
    seq, bs = 8, 2
    obs_dim, goal_dim, action_dim = 16, 4, 4
    nl, n_hidden, n_hidden2 = 1, 64, 64

    root = jax.random.PRNGKey(0)
    kp, ko, kl, kn = jax.random.split(root, 4)
    params = init_params(kp, nl, obs_dim, goal_dim, action_dim,
                         n_hidden, n_hidden2)
    observations = jax.random.normal(ko, (seq, bs, obs_dim), jnp.float32)
    lps = jax.random.normal(kl, (seq, bs, 1), jnp.float32)

    outs = goalrnn_forward(params, observations, lps, kn,
                           n_hidden=n_hidden, goal_dim=goal_dim,
                           action_dim=action_dim)
    outs = jax.block_until_ready(outs)
    actions, lpa, goals, lpg, values, lpv, gnoise, anoise, _ = outs

    ref = reference_forward(params, observations, lps, gnoise, anoise,
                            n_hidden=n_hidden, goal_dim=goal_dim,
                            action_dim=action_dim)
    got = (actions, lpa, goals, lpg, values, lpv)
    for g, r in zip(got, ref):
        np.testing.assert_allclose(np.asarray(g), np.asarray(r),
                                   rtol=2e-3, atol=2e-3)
    print("KERNEL_OK")
</pallas_src>

<mosaic_0001>
module attributes {stable_mosaic.version = 11 : i64} {
  func.func @_lstm_kernel(%arg0: i32, %arg1: memref<64x512xf32, #tpu.memory_space<vmem>>, %arg2: memref<128x512xf32, #tpu.memory_space<vmem>>, %arg3: memref<64x128xf32, #tpu.memory_space<vmem>>, %arg4: memref<8x128xf32, #tpu.memory_space<vmem>>, %arg5: memref<8x128xf32, #tpu.memory_space<vmem>>) attributes {dimension_semantics = [#tpu.dimension_semantics<arbitrary>], iteration_bounds = array<i64: 1>, scalar_prefetch = 0 : i64, scratch_operands = 2 : i64, tpu.core_type = #tpu.core_type<tc>, window_params = [{transform_indices = @transform_0, window_bounds = array<i64: 64, 512>}, {pipeline_mode = #tpu.pipeline_mode<synchronous>, transform_indices = @transform_1, window_bounds = array<i64: 128, 512>}, {transform_indices = @transform_2, window_bounds = array<i64: 64, 128>}]} {
    %c0_i32 = arith.constant 0 : i32
    %0 = arith.cmpi eq, %arg0, %c0_i32 : i32
    %1 = arith.extui %0 : i1 to i32
    %c0_i32_0 = arith.constant 0 : i32
    %2 = arith.cmpi ne, %1, %c0_i32_0 : i32
    scf.if %2 {
      %cst_50 = arith.constant 0.000000e+00 : f32
      %200 = vector.broadcast %cst_50 : f32 to vector<8x128xf32>
      %c0_51 = arith.constant 0 : index
      %c0_52 = arith.constant 0 : index
      %201 = vector.load %arg4[%c0_51, %c0_52] : memref<8x128xf32, #tpu.memory_space<vmem>>, vector<8x128xf32>
      tpu.vector_store %arg4[%c0_51, %c0_52], %200 {strides = array<i32>} : memref<8x128xf32, #tpu.memory_space<vmem>>, vector<8x128xf32>,
      %cst_53 = arith.constant 0.000000e+00 : f32
      %202 = vector.broadcast %cst_53 : f32 to vector<8x128xf32>
      %c0_54 = arith.constant 0 : index
      %c0_55 = arith.constant 0 : index
      %203 = vector.load %arg5[%c0_54, %c0_55] : memref<8x128xf32, #tpu.memory_space<vmem>>, vector<8x128xf32>
      tpu.vector_store %arg5[%c0_54, %c0_55], %202 {strides = array<i32>} : memref<8x128xf32, #tpu.memory_space<vmem>>, vector<8x128xf32>,
    } else {
    }
    %c0 = arith.constant 0 : index
    %c0_1 = arith.constant 0 : index
    %3 = vector.load %arg2[%c0, %c0_1] : memref<128x512xf32, #tpu.memory_space<vmem>>, vector<128x512xf32>
    %c0_2 = arith.constant 0 : index
    %c0_3 = arith.constant 0 : index
    %4 = vector.load %arg4[%c0_2, %c0_3] : memref<8x128xf32, #tpu.memory_space<vmem>>, vector<8x128xf32>
    %c0_4 = arith.constant 0 : index
    %c0_5 = arith.constant 0 : index
    %5 = vector.load %arg5[%c0_4, %c0_5] : memref<8x128xf32, #tpu.memory_space<vmem>>, vector<8x128xf32>
    %c0_i32_6 = arith.constant 0 : i32
    %c8_i32 = arith.constant 8 : i32
    %6 = arith.muli %c0_i32_6, %c8_i32 : i32
    %7 = tpu.assume_multiple %6, 8 : i32
    %8 = arith.index_cast %7 : i32 to index
    %c0_7 = arith.constant 0 : index
    %9 = vector.load %arg1[%8, %c0_7] : memref<64x512xf32, #tpu.memory_space<vmem>>, vector<8x512xf32>
    %cst = arith.constant dense<0.000000e+00> : vector<8x512xf32>
    %10 = tpu.matmul %4, %3, %cst {dimension_numbers = #tpu.dot_dimension_numbers<[1], [0], [0], [1], [0, 0, 1, 1], [], []>} : vector<8x128xf32>, vector<128x512xf32>, vector<8x512xf32> -> vector<8x512xf32>
    %11 = arith.addf %9, %10 : vector<8x512xf32>
    %12 = vector.extract_strided_slice %11 {offsets = [0, 0], sizes = [8, 384], strides = [1, 1]} : vector<8x512xf32> to vector<8x384xf32>
    %13 = arith.negf %12 : vector<8x384xf32>
    %14 = math.exp %13 : vector<8x384xf32>
    %cst_8 = arith.constant 1.000000e+00 : f32
    %15 = vector.broadcast %cst_8 : f32 to vector<8x384xf32>
    %16 = arith.addf %15, %14 : vector<8x384xf32>
    %17 = arith.divf %15, %16 : vector<8x384xf32>
    %18 = vector.extract_strided_slice %11 {offsets = [0, 384], sizes = [8, 128], strides = [1, 1]} : vector<8x512xf32> to vector<8x128xf32>
    %19 = math.tanh %18 : vector<8x128xf32>
    %20 = vector.extract_strided_slice %17 {offsets = [0, 0], sizes = [8, 128], strides = [1, 1]} : vector<8x384xf32> to vector<8x128xf32>
    %21 = vector.extract_strided_slice %17 {offsets = [0, 128], sizes = [8, 128], strides = [1, 1]} : vector<8x384xf32> to vector<8x128xf32>
    %22 = vector.extract_strided_slice %17 {offsets = [0, 256], sizes = [8, 128], strides = [1, 1]} : vector<8x384xf32> to vector<8x128xf32>
    %23 = arith.mulf %21, %5 : vector<8x128xf32>
    %24 = arith.mulf %20, %19 : vector<8x128xf32>
    %25 = arith.addf %23, %24 : vector<8x128xf32>
    %26 = math.tanh %25 : vector<8x128xf32>
    %27 = arith.mulf %22, %26 : vector<8x128xf32>
    %28 = arith.index_cast %7 : i32 to index
    %c0_9 = arith.constant 0 : index
    %29 = vector.load %arg3[%28, %c0_9] : memref<64x128xf32, #tpu.memory_space<vmem>>, vector<8x128xf32>
    tpu.vector_store %arg3[%28, %c0_9], %27 {strides = array<i32>} : memref<64x128xf32, #tpu.memory_space<vmem>>, vector<8x128xf32>,
    %c1_i32 = arith.constant 1 : i32
    %c8_i32_10 = arith.constant 8 : i32
    %30 = arith.muli %c1_i32, %c8_i32_10 : i32
    %31 = tpu.assume_multiple %30, 8 : i32
    %32 = arith.index_cast %31 : i32 to index
    %c0_11 = arith.constant 0 : index
    %33 = vector.load %arg1[%32, %c0_11] : memref<64x512xf32, #tpu.memory_space<vmem>>, vector<8x512xf32>
    %cst_12 = arith.constant dense<0.000000e+00> : vector<8x512xf32>
    %34 = tpu.matmul %27, %3, %cst_12 {dimension_numbers = #tpu.dot_dimension_numbers<[1], [0], [0], [1], [0, 0, 1, 1], [], []>} : vector<8x128xf32>, vector<128x512xf32>, vector<8x512xf32> -> vector<8x512xf32>
    %35 = arith.addf %33, %34 : vector<8x512xf32>
    %36 = vector.extract_strided_slice %35 {offsets = [0, 0], sizes = [8, 384], strides = [1, 1]} : vector<8x512xf32> to vector<8x384xf32>
    %37 = arith.negf %36 : vector<8x384xf32>
    %38 = math.exp %37 : vector<8x384xf32>
    %cst_13 = arith.constant 1.000000e+00 : f32
    %39 = vector.broadcast %cst_13 : f32 to vector<8x384xf32>
    %40 = arith.addf %39, %38 : vector<8x384xf32>
    %41 = arith.divf %39, %40 : vector<8x384xf32>
    %42 = vector.extract_strided_slice %35 {offsets = [0, 384], sizes = [8, 128], strides = [1, 1]} : vector<8x512xf32> to vector<8x128xf32>
    %43 = math.tanh %42 : vector<8x128xf32>
    %44 = vector.extract_strided_slice %41 {offsets = [0, 0], sizes = [8, 128], strides = [1, 1]} : vector<8x384xf32> to vector<8x128xf32>
    %45 = vector.extract_strided_slice %41 {offsets = [0, 128], sizes = [8, 128], strides = [1, 1]} : vector<8x384xf32> to vector<8x128xf32>
    %46 = vector.extract_strided_slice %41 {offsets = [0, 256], sizes = [8, 128], strides = [1, 1]} : vector<8x384xf32> to vector<8x128xf32>
    %47 = arith.mulf %45, %25 : vector<8x128xf32>
    %48 = arith.mulf %44, %43 : vector<8x128xf32>
    %49 = arith.addf %47, %48 : vector<8x128xf32>
    %50 = math.tanh %49 : vector<8x128xf32>
    %51 = arith.mulf %46, %50 : vector<8x128xf32>
    %52 = arith.index_cast %31 : i32 to index
    %c0_14 = arith.constant 0 : index
    %53 = vector.load %arg3[%52, %c0_14] : memref<64x128xf32, #tpu.memory_space<vmem>>, vector<8x128xf32>
    tpu.vector_store %arg3[%52, %c0_14], %51 {strides = array<i32>} : memref<64x128xf32, #tpu.memory_space<vmem>>, vector<8x128xf32>,
    %c2_i32 = arith.constant 2 : i32
    %c8_i32_15 = arith.constant 8 : i32
    %54 = arith.muli %c2_i32, %c8_i32_15 : i32
    %55 = tpu.assume_multiple %54, 8 : i32
    %56 = arith.index_cast %55 : i32 to index
    %c0_16 = arith.constant 0 : index
    %57 = vector.load %arg1[%56, %c0_16] : memref<64x512xf32, #tpu.memory_space<vmem>>, vector<8x512xf32>
    %cst_17 = arith.constant dense<0.000000e+00> : vector<8x512xf32>
    %58 = tpu.matmul %51, %3, %cst_17 {dimension_numbers = #tpu.dot_dimension_numbers<[1], [0], [0], [1], [0, 0, 1, 1], [], []>} : vector<8x128xf32>, vector<128x512xf32>, vector<8x512xf32> -> vector<8x512xf32>
    %59 = arith.addf %57, %58 : vector<8x512xf32>
    %60 = vector.extract_strided_slice %59 {offsets = [0, 0], sizes = [8, 384], strides = [1, 1]} : vector<8x512xf32> to vector<8x384xf32>
    %61 = arith.negf %60 : vector<8x384xf32>
    %62 = math.exp %61 : vector<8x384xf32>
    %cst_18 = arith.constant 1.000000e+00 : f32
    %63 = vector.broadcast %cst_18 : f32 to vector<8x384xf32>
    %64 = arith.addf %63, %62 : vector<8x384xf32>
    %65 = arith.divf %63, %64 : vector<8x384xf32>
    %66 = vector.extract_strided_slice %59 {offsets = [0, 384], sizes = [8, 128], strides = [1, 1]} : vector<8x512xf32> to vector<8x128xf32>
    %67 = math.tanh %66 : vector<8x128xf32>
    %68 = vector.extract_strided_slice %65 {offsets = [0, 0], sizes = [8, 128], strides = [1, 1]} : vector<8x384xf32> to vector<8x128xf32>
    %69 = vector.extract_strided_slice %65 {offsets = [0, 128], sizes = [8, 128], strides = [1, 1]} : vector<8x384xf32> to vector<8x128xf32>
    %70 = vector.extract_strided_slice %65 {offsets = [0, 256], sizes = [8, 128], strides = [1, 1]} : vector<8x384xf32> to vector<8x128xf32>
    %71 = arith.mulf %69, %49 : vector<8x128xf32>
    %72 = arith.mulf %68, %67 : vector<8x128xf32>
    %73 = arith.addf %71, %72 : vector<8x128xf32>
    %74 = math.tanh %73 : vector<8x128xf32>
    %75 = arith.mulf %70, %74 : vector<8x128xf32>
    %76 = arith.index_cast %55 : i32 to index
    %c0_19 = arith.constant 0 : index
    %77 = vector.load %arg3[%76, %c0_19] : memref<64x128xf32, #tpu.memory_space<vmem>>, vector<8x128xf32>
    tpu.vector_store %arg3[%76, %c0_19], %75 {strides = array<i32>} : memref<64x128xf32, #tpu.memory_space<vmem>>, vector<8x128xf32>,
    %c3_i32 = arith.constant 3 : i32
    %c8_i32_20 = arith.constant 8 : i32
    %78 = arith.muli %c3_i32, %c8_i32_20 : i32
    %79 = tpu.assume_multiple %78, 8 : i32
    %80 = arith.index_cast %79 : i32 to index
    %c0_21 = arith.constant 0 : index
    %81 = vector.load %arg1[%80, %c0_21] : memref<64x512xf32, #tpu.memory_space<vmem>>, vector<8x512xf32>
    %cst_22 = arith.constant dense<0.000000e+00> : vector<8x512xf32>
    %82 = tpu.matmul %75, %3, %cst_22 {dimension_numbers = #tpu.dot_dimension_numbers<[1], [0], [0], [1], [0, 0, 1, 1], [], []>} : vector<8x128xf32>, vector<128x512xf32>, vector<8x512xf32> -> vector<8x512xf32>
    %83 = arith.addf %81, %82 : vector<8x512xf32>
    %84 = vector.extract_strided_slice %83 {offsets = [0, 0], sizes = [8, 384], strides = [1, 1]} : vector<8x512xf32> to vector<8x384xf32>
    %85 = arith.negf %84 : vector<8x384xf32>
    %86 = math.exp %85 : vector<8x384xf32>
    %cst_23 = arith.constant 1.000000e+00 : f32
    %87 = vector.broadcast %cst_23 : f32 to vector<8x384xf32>
    %88 = arith.addf %87, %86 : vector<8x384xf32>
    %89 = arith.divf %87, %88 : vector<8x384xf32>
    %90 = vector.extract_strided_slice %83 {offsets = [0, 384], sizes = [8, 128], strides = [1, 1]} : vector<8x512xf32> to vector<8x128xf32>
    %91 = math.tanh %90 : vector<8x128xf32>
    %92 = vector.extract_strided_slice %89 {offsets = [0, 0], sizes = [8, 128], strides = [1, 1]} : vector<8x384xf32> to vector<8x128xf32>
    %93 = vector.extract_strided_slice %89 {offsets = [0, 128], sizes = [8, 128], strides = [1, 1]} : vector<8x384xf32> to vector<8x128xf32>
    %94 = vector.extract_strided_slice %89 {offsets = [0, 256], sizes = [8, 128], strides = [1, 1]} : vector<8x384xf32> to vector<8x128xf32>
    %95 = arith.mulf %93, %73 : vector<8x128xf32>
    %96 = arith.mulf %92, %91 : vector<8x128xf32>
    %97 = arith.addf %95, %96 : vector<8x128xf32>
    %98 = math.tanh %97 : vector<8x128xf32>
    %99 = arith.mulf %94, %98 : vector<8x128xf32>
    %100 = arith.index_cast %79 : i32 to index
    %c0_24 = arith.constant 0 : index
    %101 = vector.load %arg3[%100, %c0_24] : memref<64x128xf32, #tpu.memory_space<vmem>>, vector<8x128xf32>
    tpu.vector_store %arg3[%100, %c0_24], %99 {strides = array<i32>} : memref<64x128xf32, #tpu.memory_space<vmem>>, vector<8x128xf32>,
    %c4_i32 = arith.constant 4 : i32
    %c8_i32_25 = arith.constant 8 : i32
    %102 = arith.muli %c4_i32, %c8_i32_25 : i32
    %103 = tpu.assume_multiple %102, 8 : i32
    %104 = arith.index_cast %103 : i32 to index
    %c0_26 = arith.constant 0 : index
    %105 = vector.load %arg1[%104, %c0_26] : memref<64x512xf32, #tpu.memory_space<vmem>>, vector<8x512xf32>
    %cst_27 = arith.constant dense<0.000000e+00> : vector<8x512xf32>
    %106 = tpu.matmul %99, %3, %cst_27 {dimension_numbers = #tpu.dot_dimension_numbers<[1], [0], [0], [1], [0, 0, 1, 1], [], []>} : vector<8x128xf32>, vector<128x512xf32>, vector<8x512xf32> -> vector<8x512xf32>
    %107 = arith.addf %105, %106 : vector<8x512xf32>
    %108 = vector.extract_strided_slice %107 {offsets = [0, 0], sizes = [8, 384], strides = [1, 1]} : vector<8x512xf32> to vector<8x384xf32>
    %109 = arith.negf %108 : vector<8x384xf32>
    %110 = math.exp %109 : vector<8x384xf32>
    %cst_28 = arith.constant 1.000000e+00 : f32
    %111 = vector.broadcast %cst_28 : f32 to vector<8x384xf32>
    %112 = arith.addf %111, %110 : vector<8x384xf32>
    %113 = arith.divf %111, %112 : vector<8x384xf32>
    %114 = vector.extract_strided_slice %107 {offsets = [0, 384], sizes = [8, 128], strides = [1, 1]} : vector<8x512xf32> to vector<8x128xf32>
    %115 = math.tanh %114 : vector<8x128xf32>
    %116 = vector.extract_strided_slice %113 {offsets = [0, 0], sizes = [8, 128], strides = [1, 1]} : vector<8x384xf32> to vector<8x128xf32>
    %117 = vector.extract_strided_slice %113 {offsets = [0, 128], sizes = [8, 128], strides = [1, 1]} : vector<8x384xf32> to vector<8x128xf32>
    %118 = vector.extract_strided_slice %113 {offsets = [0, 256], sizes = [8, 128], strides = [1, 1]} : vector<8x384xf32> to vector<8x128xf32>
    %119 = arith.mulf %117, %97 : vector<8x128xf32>
    %120 = arith.mulf %116, %115 : vector<8x128xf32>
    %121 = arith.addf %119, %120 : vector<8x128xf32>
    %122 = math.tanh %121 : vector<8x128xf32>
    %123 = arith.mulf %118, %122 : vector<8x128xf32>
    %124 = arith.index_cast %103 : i32 to index
    %c0_29 = arith.constant 0 : index
    %125 = vector.load %arg3[%124, %c0_29] : memref<64x128xf32, #tpu.memory_space<vmem>>, vector<8x128xf32>
    tpu.vector_store %arg3[%124, %c0_29], %123 {strides = array<i32>} : memref<64x128xf32, #tpu.memory_space<vmem>>, vector<8x128xf32>,
    %c5_i32 = arith.constant 5 : i32
    %c8_i32_30 = arith.constant 8 : i32
    %126 = arith.muli %c5_i32, %c8_i32_30 : i32
    %127 = tpu.assume_multiple %126, 8 : i32
    %128 = arith.index_cast %127 : i32 to index
    %c0_31 = arith.constant 0 : index
    %129 = vector.load %arg1[%128, %c0_31] : memref<64x512xf32, #tpu.memory_space<vmem>>, vector<8x512xf32>
    %cst_32 = arith.constant dense<0.000000e+00> : vector<8x512xf32>
    %130 = tpu.matmul %123, %3, %cst_32 {dimension_numbers = #tpu.dot_dimension_numbers<[1], [0], [0], [1], [0, 0, 1, 1], [], []>} : vector<8x128xf32>, vector<128x512xf32>, vector<8x512xf32> -> vector<8x512xf32>
    %131 = arith.addf %129, %130 : vector<8x512xf32>
    %132 = vector.extract_strided_slice %131 {offsets = [0, 0], sizes = [8, 384], strides = [1, 1]} : vector<8x512xf32> to vector<8x384xf32>
    %133 = arith.negf %132 : vector<8x384xf32>
    %134 = math.exp %133 : vector<8x384xf32>
    %cst_33 = arith.constant 1.000000e+00 : f32
    %135 = vector.broadcast %cst_33 : f32 to vector<8x384xf32>
    %136 = arith.addf %135, %134 : vector<8x384xf32>
    %137 = arith.divf %135, %136 : vector<8x384xf32>
    %138 = vector.extract_strided_slice %131 {offsets = [0, 384], sizes = [8, 128], strides = [1, 1]} : vector<8x512xf32> to vector<8x128xf32>
    %139 = math.tanh %138 : vector<8x128xf32>
    %140 = vector.extract_strided_slice %137 {offsets = [0, 0], sizes = [8, 128], strides = [1, 1]} : vector<8x384xf32> to vector<8x128xf32>
    %141 = vector.extract_strided_slice %137 {offsets = [0, 128], sizes = [8, 128], strides = [1, 1]} : vector<8x384xf32> to vector<8x128xf32>
    %142 = vector.extract_strided_slice %137 {offsets = [0, 256], sizes = [8, 128], strides = [1, 1]} : vector<8x384xf32> to vector<8x128xf32>
    %143 = arith.mulf %141, %121 : vector<8x128xf32>
    %144 = arith.mulf %140, %139 : vector<8x128xf32>
    %145 = arith.addf %143, %144 : vector<8x128xf32>
    %146 = math.tanh %145 : vector<8x128xf32>
    %147 = arith.mulf %142, %146 : vector<8x128xf32>
    %148 = arith.index_cast %127 : i32 to index
    %c0_34 = arith.constant 0 : index
    %149 = vector.load %arg3[%148, %c0_34] : memref<64x128xf32, #tpu.memory_space<vmem>>, vector<8x128xf32>
    tpu.vector_store %arg3[%148, %c0_34], %147 {strides = array<i32>} : memref<64x128xf32, #tpu.memory_space<vmem>>, vector<8x128xf32>,
    %c6_i32 = arith.constant 6 : i32
    %c8_i32_35 = arith.constant 8 : i32
    %150 = arith.muli %c6_i32, %c8_i32_35 : i32
    %151 = tpu.assume_multiple %150, 8 : i32
    %152 = arith.index_cast %151 : i32 to index
    %c0_36 = arith.constant 0 : index
    %153 = vector.load %arg1[%152, %c0_36] : memref<64x512xf32, #tpu.memory_space<vmem>>, vector<8x512xf32>
    %cst_37 = arith.constant dense<0.000000e+00> : vector<8x512xf32>
    %154 = tpu.matmul %147, %3, %cst_37 {dimension_numbers = #tpu.dot_dimension_numbers<[1], [0], [0], [1], [0, 0, 1, 1], [], []>} : vector<8x128xf32>, vector<128x512xf32>, vector<8x512xf32> -> vector<8x512xf32>
    %155 = arith.addf %153, %154 : vector<8x512xf32>
    %156 = vector.extract_strided_slice %155 {offsets = [0, 0], sizes = [8, 384], strides = [1, 1]} : vector<8x512xf32> to vector<8x384xf32>
    %157 = arith.negf %156 : vector<8x384xf32>
    %158 = math.exp %157 : vector<8x384xf32>
    %cst_38 = arith.constant 1.000000e+00 : f32
    %159 = vector.broadcast %cst_38 : f32 to vector<8x384xf32>
    %160 = arith.addf %159, %158 : vector<8x384xf32>
    %161 = arith.divf %159, %160 : vector<8x384xf32>
    %162 = vector.extract_strided_slice %155 {offsets = [0, 384], sizes = [8, 128], strides = [1, 1]} : vector<8x512xf32> to vector<8x128xf32>
    %163 = math.tanh %162 : vector<8x128xf32>
    %164 = vector.extract_strided_slice %161 {offsets = [0, 0], sizes = [8, 128], strides = [1, 1]} : vector<8x384xf32> to vector<8x128xf32>
    %165 = vector.extract_strided_slice %161 {offsets = [0, 128], sizes = [8, 128], strides = [1, 1]} : vector<8x384xf32> to vector<8x128xf32>
    %166 = vector.extract_strided_slice %161 {offsets = [0, 256], sizes = [8, 128], strides = [1, 1]} : vector<8x384xf32> to vector<8x128xf32>
    %167 = arith.mulf %165, %145 : vector<8x128xf32>
    %168 = arith.mulf %164, %163 : vector<8x128xf32>
    %169 = arith.addf %167, %168 : vector<8x128xf32>
    %170 = math.tanh %169 : vector<8x128xf32>
    %171 = arith.mulf %166, %170 : vector<8x128xf32>
    %172 = arith.index_cast %151 : i32 to index
    %c0_39 = arith.constant 0 : index
    %173 = vector.load %arg3[%172, %c0_39] : memref<64x128xf32, #tpu.memory_space<vmem>>, vector<8x128xf32>
    tpu.vector_store %arg3[%172, %c0_39], %171 {strides = array<i32>} : memref<64x128xf32, #tpu.memory_space<vmem>>, vector<8x128xf32>,
    %c7_i32 = arith.constant 7 : i32
    %c8_i32_40 = arith.constant 8 : i32
    %174 = arith.muli %c7_i32, %c8_i32_40 : i32
    %175 = tpu.assume_multiple %174, 8 : i32
    %176 = arith.index_cast %175 : i32 to index
    %c0_41 = arith.constant 0 : index
    %177 = vector.load %arg1[%176, %c0_41] : memref<64x512xf32, #tpu.memory_space<vmem>>, vector<8x512xf32>
    %cst_42 = arith.constant dense<0.000000e+00> : vector<8x512xf32>
    %178 = tpu.matmul %171, %3, %cst_42 {dimension_numbers = #tpu.dot_dimension_numbers<[1], [0], [0], [1], [0, 0, 1, 1], [], []>} : vector<8x128xf32>, vector<128x512xf32>, vector<8x512xf32> -> vector<8x512xf32>
    %179 = arith.addf %177, %178 : vector<8x512xf32>
    %180 = vector.extract_strided_slice %179 {offsets = [0, 0], sizes = [8, 384], strides = [1, 1]} : vector<8x512xf32> to vector<8x384xf32>
    %181 = arith.negf %180 : vector<8x384xf32>
    %182 = math.exp %181 : vector<8x384xf32>
    %cst_43 = arith.constant 1.000000e+00 : f32
    %183 = vector.broadcast %cst_43 : f32 to vector<8x384xf32>
    %184 = arith.addf %183, %182 : vector<8x384xf32>
    %185 = arith.divf %183, %184 : vector<8x384xf32>
    %186 = vector.extract_strided_slice %179 {offsets = [0, 384], sizes = [8, 128], strides = [1, 1]} : vector<8x512xf32> to vector<8x128xf32>
    %187 = math.tanh %186 : vector<8x128xf32>
    %188 = vector.extract_strided_slice %185 {offsets = [0, 0], sizes = [8, 128], strides = [1, 1]} : vector<8x384xf32> to vector<8x128xf32>
    %189 = vector.extract_strided_slice %185 {offsets = [0, 128], sizes = [8, 128], strides = [1, 1]} : vector<8x384xf32> to vector<8x128xf32>
    %190 = vector.extract_strided_slice %185 {offsets = [0, 256], sizes = [8, 128], strides = [1, 1]} : vector<8x384xf32> to vector<8x128xf32>
    %191 = arith.mulf %189, %169 : vector<8x128xf32>
    %192 = arith.mulf %188, %187 : vector<8x128xf32>
    %193 = arith.addf %191, %192 : vector<8x128xf32>
    %194 = math.tanh %193 : vector<8x128xf32>
    %195 = arith.mulf %190, %194 : vector<8x128xf32>
    %196 = arith.index_cast %175 : i32 to index
    %c0_44 = arith.constant 0 : index
    %197 = vector.load %arg3[%196, %c0_44] : memref<64x128xf32, #tpu.memory_space<vmem>>, vector<8x128xf32>
    tpu.vector_store %arg3[%196, %c0_44], %195 {strides = array<i32>} : memref<64x128xf32, #tpu.memory_space<vmem>>, vector<8x128xf32>,
    %c8_i32_45 = arith.constant 8 : i32
    %c0_46 = arith.constant 0 : index
    %c0_47 = arith.constant 0 : index
    %198 = vector.load %arg4[%c0_46, %c0_47] : memref<8x128xf32, #tpu.memory_space<vmem>>, vector<8x128xf32>
    tpu.vector_store %arg4[%c0_46, %c0_47], %195 {strides = array<i32>} : memref<8x128xf32, #tpu.memory_space<vmem>>, vector<8x128xf32>,
    %c0_48 = arith.constant 0 : index
    %c0_49 = arith.constant 0 : index
    %199 = vector.load %arg5[%c0_48, %c0_49] : memref<8x128xf32, #tpu.memory_space<vmem>>, vector<8x128xf32>
    tpu.vector_store %arg5[%c0_48, %c0_49], %193 {strides = array<i32>} : memref<8x128xf32, #tpu.memory_space<vmem>>, vector<8x128xf32>,
    return
  }
  func.func @transform_0(%arg0: i32) -> (i32, i32) {
    %c0_i32 = arith.constant 0 : i32
    %c0_i32_0 = arith.constant 0 : i32
    return %arg0, %c0_i32 : i32, i32
  }
  func.func @transform_1(%arg0: i32) -> (i32, i32) {
    %c0_i32 = arith.constant 0 : i32
    %c0_i32_0 = arith.constant 0 : i32
    %c0_i32_1 = arith.constant 0 : i32
    return %c0_i32, %c0_i32_0 : i32, i32
  }
  func.func @transform_2(%arg0: i32) -> (i32, i32) {
    %c0_i32 = arith.constant 0 : i32
    %c0_i32_0 = arith.constant 0 : i32
    return %arg0, %c0_i32 : i32, i32
  }
}

</mosaic_0001>

<llo_original>
// kernel: tpu_custom_call.1
$region0: #{tpu_custom_call.1}
  #allocation0 [shape = 'u32[]', space=smem, size = 0x4, offset = 0x4, fixed_abs, tag = 'smem constant byte address 0x4 - core index']
  #allocation1 [shape = 'u32[72,128]{1,0:T(1,128)}', space=vmem, size = 0x9000, scoped, tag = 'internal scratch']
  #allocation2 [shape = 'f32[8,128]{1,0:T(8,128)}', space=vmem, size = 0x1000, scoped, tag = 'scratch operand']
  #allocation3 [shape = 'f32[8,128]{1,0:T(8,128)}', space=vmem, size = 0x1000, scoped, tag = 'scratch operand']
  %s0 = inlined_call_operand.hbm [shape: f32[64,512], index: 0, kind: input, shape index: {}]
  %s1 = inlined_call_operand.hbm [shape: f32[128,512], index: 1, kind: input, shape index: {}]
  %s2 = inlined_call_operand.hbm [shape: f32[64,128], index: 2, kind: output, shape index: {}]
  %s3 = sld [smem:[#allocation0]]
  $region30: #{tpu_custom_call.1} parent=0
    _
  %s5 = ssub.s32 1, %s3
  %s6 = scalar_select 0, %s5, %s3
  $region1: #{tpu_custom_call.1} parent=0
    #allocation4 [shape = 'u8[131072]{0}', space=vmem, size = 0x20000, scoped, tag = 'input window, operand 0, single buffered']
    #allocation5 [shape = 's32[1]{0}', space=sflag, size = 0x4, scoped, tag = 'scoped memory for tpu_custom_call.1']
    #allocation6 [shape = 's32[1]{0}', space=sflag, size = 0x4, scoped, tag = 'scoped memory for tpu_custom_call.1']
    #allocation7 [shape = 'u8[262144]{0}', space=vmem, size = 0x40000, scoped, tag = 'input window, operand 1, single buffered']
    #allocation8 [shape = 's32[1]{0}', space=sflag, size = 0x4, scoped, tag = 'scoped memory for tpu_custom_call.1']
    #allocation9 [shape = 'u8[32768]{0}', space=vmem, size = 0x8000, scoped, tag = 'output window, operand 0, single buffered']
    %7 = vsyncpa [#allocation5], 0
    %8 = vsyncpa [#allocation8], 0
    %9 = vsyncpa [#allocation6], 0
    // Predicated region
    $region2: #{tpu_custom_call.1} parent=1 // pred_check
      _
    $region3: #{tpu_custom_call.1} parent=1 // pred_check_branch
      %11 = sbr.rel (0) target = $region5
    $region4: #{tpu_custom_call.1} parent=1 // pred_region
      %13 = vsyncadd [#allocation5], 0
      %s14 = sshll.u32 %s0, 4
      %s15 = int_to_ptr.hbm [resolvable:$true] %s14
      %s16 = sshll.u32 [#allocation4], 4
      %s17 = int_to_ptr.vmem [resolvable:$true] %s16
      %22 = dma.hbm_to_vmem [thread:$0]  %s15, 4096, %s17, [#allocation5], 512, 512, 32
    $region5: #{tpu_custom_call.1} parent=1 // pred_fallthru
      _
    // Predicated region
    $region6: #{tpu_custom_call.1} parent=1 // pred_check
      _
    $region7: #{tpu_custom_call.1} parent=1 // pred_check_branch
      %24 = sbr.rel (0) target = $region9
    $region8: #{tpu_custom_call.1} parent=1 // pred_region
      %26 = vsyncadd [#allocation8], 0
      %s27 = sshll.u32 %s1, 4
      %s28 = int_to_ptr.hbm [resolvable:$true] %s27
      %s29 = sshll.u32 [#allocation7], 4
      %s30 = int_to_ptr.vmem [resolvable:$true] %s29
      %35 = dma.hbm_to_vmem [thread:$0]  %s28, 8192, %s30, [#allocation8], 512, 512, 32
    $region9: #{tpu_custom_call.1} parent=1 // pred_fallthru
      _
    // Predicated region
    $region10: #{tpu_custom_call.1} parent=1 // pred_check
      _
    $region11: #{tpu_custom_call.1} parent=1 // pred_check_branch
      %37 = sbr.rel (0) target = $region13
    $region12: #{tpu_custom_call.1} parent=1 // pred_region
      %39 = dma.done [#allocation5], 4096
    $region13: #{tpu_custom_call.1} parent=1 // pred_fallthru
      _
    // Predicated region
    $region14: #{tpu_custom_call.1} parent=1 // pred_check
      _
    $region15: #{tpu_custom_call.1} parent=1 // pred_check_branch
      %41 = sbr.rel (0) target = $region17
    $region16: #{tpu_custom_call.1} parent=1 // pred_region
      %43 = dma.done [#allocation8], 8192
    $region17: #{tpu_custom_call.1} parent=1 // pred_fallthru
      _
    %p44 = scmp.eq.s32.totalorder 0, 0
    // Predicated region
    $region18: #{tpu_custom_call.1} parent=1 // pred_check
      %p45 = pneg %p44
    $region19: #{tpu_custom_call.1} parent=1 // pred_check_branch
      %47 = sbr.rel (%p45) target = $region21
    $region20: #{tpu_custom_call.1} parent=1 // pred_region
      %48 = vst [vmem:[#allocation2] sm:$0xff] 0.0
      %49 = vst [vmem:[#allocation3] sm:$0xff] 0.0
    $region21: #{tpu_custom_call.1} parent=1 // pred_fallthru
      _
    %v50 = vld [vmem:[#allocation7] sm:$0xff]
    %v51 = vld [vmem:[#allocation7 + $0x8] sm:$0xff]
    %v52 = vld [vmem:[#allocation7 + $0x10] sm:$0xff]
    %v53 = vld [vmem:[#allocation7 + $0x18] sm:$0xff]
    %v54 = vld [vmem:[#allocation7 + $0x20] sm:$0xff]
    %v55 = vld [vmem:[#allocation7 + $0x28] sm:$0xff]
    %v56 = vld [vmem:[#allocation7 + $0x30] sm:$0xff]
    %v57 = vld [vmem:[#allocation7 + $0x38] sm:$0xff]
    %v58 = vld [vmem:[#allocation7 + $0x40] sm:$0xff]
    %v59 = vld [vmem:[#allocation7 + $0x48] sm:$0xff]
    %v60 = vld [vmem:[#allocation7 + $0x50] sm:$0xff]
    %v61 = vld [vmem:[#allocation7 + $0x58] sm:$0xff]
    %v62 = vld [vmem:[#allocation7 + $0x60] sm:$0xff]
    %v63 = vld [vmem:[#allocation7 + $0x68] sm:$0xff]
    %v64 = vld [vmem:[#allocation7 + $0x70] sm:$0xff]
    %v65 = vld [vmem:[#allocation7 + $0x78] sm:$0xff]
    %v66 = vld [vmem:[#allocation7 + $0x80] sm:$0xff]
    %v67 = vld [vmem:[#allocation7 + $0x88] sm:$0xff]
    %v68 = vld [vmem:[#allocation7 + $0x90] sm:$0xff]
    %v69 = vld [vmem:[#allocation7 + $0x98] sm:$0xff]
    %v70 = vld [vmem:[#allocation7 + $0xa0] sm:$0xff]
    %v71 = vld [vmem:[#allocation7 + $0xa8] sm:$0xff]
    %v72 = vld [vmem:[#allocation7 + $0xb0] sm:$0xff]
    %v73 = vld [vmem:[#allocation7 + $0xb8] sm:$0xff]
    %v74 = vld [vmem:[#allocation7 + $0xc0] sm:$0xff]
    %v75 = vld [vmem:[#allocation7 + $0xc8] sm:$0xff]
    %v76 = vld [vmem:[#allocation7 + $0xd0] sm:$0xff]
    %v77 = vld [vmem:[#allocation7 + $0xd8] sm:$0xff]
    %v78 = vld [vmem:[#allocation7 + $0xe0] sm:$0xff]
    %v79 = vld [vmem:[#allocation7 + $0xe8] sm:$0xff]
    %v80 = vld [vmem:[#allocation7 + $0xf0] sm:$0xff]
    %v81 = vld [vmem:[#allocation7 + $0xf8] sm:$0xff]
    %v82 = vld [vmem:[#allocation7 + $0x100] sm:$0xff]
    %v83 = vld [vmem:[#allocation7 + $0x108] sm:$0xff]
    %v84 = vld [vmem:[#allocation7 + $0x110] sm:$0xff]
    %v85 = vld [vmem:[#allocation7 + $0x118] sm:$0xff]
    %v86 = vld [vmem:[#allocation7 + $0x120] sm:$0xff]
    %v87 = vld [vmem:[#allocation7 + $0x128] sm:$0xff]
    %v88 = vld [vmem:[#allocation7 + $0x130] sm:$0xff]
    %v89 = vld [vmem:[#allocation7 + $0x138] sm:$0xff]
    %v90 = vld [vmem:[#allocation7 + $0x140] sm:$0xff]
    %v91 = vld [vmem:[#allocation7 + $0x148] sm:$0xff]
    %v92 = vld [vmem:[#allocation7 + $0x150] sm:$0xff]
    %v93 = vld [vmem:[#allocation7 + $0x158] sm:$0xff]
    %v94 = vld [vmem:[#allocation7 + $0x160] sm:$0xff]
    %v95 = vld [vmem:[#allocation7 + $0x168] sm:$0xff]
    %v96 = vld [vmem:[#allocation7 + $0x170] sm:$0xff]
    %v97 = vld [vmem:[#allocation7 + $0x178] sm:$0xff]
    %v98 = vld [vmem:[#allocation7 + $0x180] sm:$0xff]
    %v99 = vld [vmem:[#allocation7 + $0x188] sm:$0xff]
    %v100 = vld [vmem:[#allocation7 + $0x190] sm:$0xff]
    %v101 = vld [vmem:[#allocation7 + $0x198] sm:$0xff]
    %v102 = vld [vmem:[#allocation7 + $0x1a0] sm:$0xff]
    %v103 = vld [vmem:[#allocation7 + $0x1a8] sm:$0xff]
    %v104 = vld [vmem:[#allocation7 + $0x1b0] sm:$0xff]
    %v105 = vld [vmem:[#allocation7 + $0x1b8] sm:$0xff]
    %v106 = vld [vmem:[#allocation7 + $0x1c0] sm:$0xff]
    %v107 = vld [vmem:[#allocation7 + $0x1c8] sm:$0xff]
    %v108 = vld [vmem:[#allocation7 + $0x1d0] sm:$0xff]
    %v109 = vld [vmem:[#allocation7 + $0x1d8] sm:$0xff]
    %v110 = vld [vmem:[#allocation7 + $0x1e0] sm:$0xff]
    %v111 = vld [vmem:[#allocation7 + $0x1e8] sm:$0xff]
    %v112 = vld [vmem:[#allocation7 + $0x1f0] sm:$0xff]
    %v113 = vld [vmem:[#allocation7 + $0x1f8] sm:$0xff]
    %v114 = vld [vmem:[#allocation2] sm:$0xff]
    %v115 = vld [vmem:[#allocation3] sm:$0xff]
    %s116 = smul.u32 0, 4
    %s117 = smul.addr %s116, 8
    %s118 = scalar_lea.vmem [#allocation4], %s117
    %v119 = vld [vmem:[%s118] sm:$0xff]
    %v120 = vld [vmem:[%s118 + $0x8] sm:$0xff]
    %v121 = vld [vmem:[%s118 + $0x10] sm:$0xff]
    %v122 = vld [vmem:[%s118 + $0x18] sm:$0xff]
    %123 = vmatpush.msra.mxu0 %v110
    %124 = vmatpush.msra.mxu0 %v106
    %125 = vmatpush.msra.mxu0 %v102
    %126 = vmatpush.msra.mxu0 %v98
    %127 = vmatpush.msra.mxu0 %v94
    %128 = vmatpush.msra.mxu0 %v90
    %129 = vmatpush.msra.mxu0 %v86
    %130 = vmatpush.msra.mxu0 %v82
    %131 = vmatpush.msra.mxu0 %v78
    %132 = vmatpush.msra.mxu0 %v74
    %133 = vmatpush.msra.mxu0 %v70
    %134 = vmatpush.msra.mxu0 %v66
    %135 = vmatpush.msra.mxu0 %v62
    %136 = vmatpush.msra.mxu0 %v58
    %137 = vmatpush.msra.mxu0 %v54
    %138 = vmatpush.msra.mxu0 %v50
    %139 = vmatmul.f32.gmra.mxu0 %v114
    %v140 = vpop.f32.mrf.mxu0
    %v141 = vadd.f32 0.0, %v140
    %142 = vdwg.mxu0
    %143 = vmatpush.msra.mxu0 %v111
    %144 = vmatpush.msra.mxu0 %v107
    %145 = vmatpush.msra.mxu0 %v103
    %146 = vmatpush.msra.mxu0 %v99
    %147 = vmatpush.msra.mxu0 %v95
    %148 = vmatpush.msra.mxu0 %v91
    %149 = vmatpush.msra.mxu0 %v87
    %150 = vmatpush.msra.mxu0 %v83
    %151 = vmatpush.msra.mxu0 %v79
    %152 = vmatpush.msra.mxu0 %v75
    %153 = vmatpush.msra.mxu0 %v71
    %154 = vmatpush.msra.mxu0 %v67
    %155 = vmatpush.msra.mxu0 %v63
    %156 = vmatpush.msra.mxu0 %v59
    %157 = vmatpush.msra.mxu0 %v55
    %158 = vmatpush.msra.mxu0 %v51
    %159 = vmatmul.f32.gmra.mxu0 %v114
    %v160 = vpop.f32.mrf.mxu0
    %v161 = vadd.f32 0.0, %v160
    %162 = vdwg.mxu0
    %163 = vmatpush.msra.mxu0 %v112
    %164 = vmatpush.msra.mxu0 %v108
    %165 = vmatpush.msra.mxu0 %v104
    %166 = vmatpush.msra.mxu0 %v100
    %167 = vmatpush.msra.mxu0 %v96
    %168 = vmatpush.msra.mxu0 %v92
    %169 = vmatpush.msra.mxu0 %v88
    %170 = vmatpush.msra.mxu0 %v84
    %171 = vmatpush.msra.mxu0 %v80
    %172 = vmatpush.msra.mxu0 %v76
    %173 = vmatpush.msra.mxu0 %v72
    %174 = vmatpush.msra.mxu0 %v68
    %175 = vmatpush.msra.mxu0 %v64
    %176 = vmatpush.msra.mxu0 %v60
    %177 = vmatpush.msra.mxu0 %v56
    %178 = vmatpush.msra.mxu0 %v52
    %179 = vmatmul.f32.gmra.mxu0 %v114
    %v180 = vpop.f32.mrf.mxu0
    %v181 = vadd.f32 0.0, %v180
    %182 = vdwg.mxu0
    %183 = vmatpush.msra.mxu0 %v113
    %184 = vmatpush.msra.mxu0 %v109
    %185 = vmatpush.msra.mxu0 %v105
    %186 = vmatpush.msra.mxu0 %v101
    %187 = vmatpush.msra.mxu0 %v97
    %188 = vmatpush.msra.mxu0 %v93
    %189 = vmatpush.msra.mxu0 %v89
    %190 = vmatpush.msra.mxu0 %v85
    %191 = vmatpush.msra.mxu0 %v81
    %192 = vmatpush.msra.mxu0 %v77
    %193 = vmatpush.msra.mxu0 %v73
    %194 = vmatpush.msra.mxu0 %v69
    %195 = vmatpush.msra.mxu0 %v65
    %196 = vmatpush.msra.mxu0 %v61
    %197 = vmatpush.msra.mxu0 %v57
    %198 = vmatpush.msra.mxu0 %v53
    %199 = vmatmul.f32.gmra.mxu0 %v114
    %v200 = vpop.f32.mrf.mxu0
    %v201 = vadd.f32 0.0, %v200
    %202 = vdwg.mxu0
    %v203 = vadd.f32 %v119, %v141
    %v204 = vadd.f32 %v120, %v161
    %v205 = vadd.f32 %v121, %v181
    %v206 = vadd.f32 %v122, %v201
    %v207 = vxor.u32 %v203, 2147483648
    %v208 = vxor.u32 %v204, 2147483648
    %v209 = vxor.u32 %v205, 2147483648
    %v210 = vmul.f32 %v207, 1.442695
    %v211 = vpow.pop %v210
    %v212 = vmul.f32 %v208, 1.442695
    %v213 = vpow.pop %v212
    %v214 = vmul.f32 %v209, 1.442695
    %v215 = vpow.pop %v214
    %v216 = vadd.f32 %v211, 1.0
    %v217 = vadd.f32 %v213, 1.0
    %v218 = vadd.f32 %v215, 1.0
    %v219 = vrcp.pop %v216
    %v220 = vmul.f32 %v216, %v219
    %v221 = vsub.f32 1.0, %v220
    %v222 = vmul.f32 %v219, %v221
    %v223 = vadd.f32 %v219, %v222
    %vm224 = vweird.f32 %v216
    %vm225 = vweird.f32 %v219
    %vm226 = vmor %vm224, %vm225
    %v227 = vsel %vm226, %v219, %v223
    %v228 = vand.u32 2147483647, %v216
    %vm229 = vcmp.eq.f32.partialorder %v228, 8.507059e+37
    %v230 = vand.u32 %v216, 2147483648
    %v231 = vor.u32 1.1754944e-38, %v230
    %v232 = vsel %vm229, %v231, %v227
    %v233 = vmul.f32 1.0, %v232
    %v234 = vrcp.pop %v217
    %v235 = vmul.f32 %v217, %v234
    %v236 = vsub.f32 1.0, %v235
    %v237 = vmul.f32 %v234, %v236
    %v238 = vadd.f32 %v234, %v237
    %vm239 = vweird.f32 %v217
    %vm240 = vweird.f32 %v234
    %vm241 = vmor %vm239, %vm240
    %v242 = vsel %vm241, %v234, %v238
    %v243 = vand.u32 2147483647, %v217
    %vm244 = vcmp.eq.f32.partialorder %v243, 8.507059e+37
    %v245 = vand.u32 %v217, 2147483648
    %v246 = vor.u32 1.1754944e-38, %v245
    %v247 = vsel %vm244, %v246, %v242
    %v248 = vmul.f32 1.0, %v247
    %v249 = vrcp.pop %v218
    %v250 = vmul.f32 %v218, %v249
    %v251 = vsub.f32 1.0, %v250
    %v252 = vmul.f32 %v249, %v251
    %v253 = vadd.f32 %v249, %v252
    %vm254 = vweird.f32 %v218
    %vm255 = vweird.f32 %v249
    %vm256 = vmor %vm254, %vm255
    %v257 = vsel %vm256, %v249, %v253
    %v258 = vand.u32 2147483647, %v218
    %vm259 = vcmp.eq.f32.partialorder %v258, 8.507059e+37
    %v260 = vand.u32 %v218, 2147483648
    %v261 = vor.u32 1.1754944e-38, %v260
    %v262 = vsel %vm259, %v261, %v257
    %v263 = vmul.f32 1.0, %v262
    %v264 = vtanh.pop %v206
    %v265 = vmul.f32 %v248, %v115
    %v266 = vmul.f32 %v233, %v264
    %v267 = vadd.f32 %v265, %v266
    %v268 = vtanh.pop %v267
    %v269 = vmul.f32 %v263, %v268
    %270 = vst [vmem:[#allocation9] sm:$0xff] %v269
    %s271 = smul.u32 1, 4
    %s272 = smul.addr %s271, 8
    %s273 = scalar_lea.vmem [#allocation4], %s272
    %v274 = vld [vmem:[%s273] sm:$0xff]
    %v275 = vld [vmem:[%s273 + $0x8] sm:$0xff]
    %v276 = vld [vmem:[%s273 + $0x10] sm:$0xff]
    %v277 = vld [vmem:[%s273 + $0x18] sm:$0xff]
    %278 = vmatpush.msra.mxu0 %v110
    %279 = vmatpush.msra.mxu0 %v106
    %280 = vmatpush.msra.mxu0 %v102
    %281 = vmatpush.msra.mxu0 %v98
    %282 = vmatpush.msra.mxu0 %v94
    %283 = vmatpush.msra.mxu0 %v90
    %284 = vmatpush.msra.mxu0 %v86
    %285 = vmatpush.msra.mxu0 %v82
    %286 = vmatpush.msra.mxu0 %v78
    %287 = vmatpush.msra.mxu0 %v74
    %288 = vmatpush.msra.mxu0 %v70
    %289 = vmatpush.msra.mxu0 %v66
    %290 = vmatpush.msra.mxu0 %v62
    %291 = vmatpush.msra.mxu0 %v58
    %292 = vmatpush.msra.mxu0 %v54
    %293 = vmatpush.msra.mxu0 %v50
    %294 = vmatmul.f32.gmra.mxu0 %v269
    %v295 = vpop.f32.mrf.mxu0
    %v296 = vadd.f32 0.0, %v295
    %297 = vdwg.mxu0
    %298 = vmatpush.msra.mxu0 %v111
    %299 = vmatpush.msra.mxu0 %v107
    %300 = vmatpush.msra.mxu0 %v103
    %301 = vmatpush.msra.mxu0 %v99
    %302 = vmatpush.msra.mxu0 %v95
    %303 = vmatpush.msra.mxu0 %v91
    %304 = vmatpush.msra.mxu0 %v87
    %305 = vmatpush.msra.mxu0 %v83
    %306 = vmatpush.msra.mxu0 %v79
    %307 = vmatpush.msra.mxu0 %v75
    %308 = vmatpush.msra.mxu0 %v71
    %309 = vmatpush.msra.mxu0 %v67
    %310 = vmatpush.msra.mxu0 %v63
    %311 = vmatpush.msra.mxu0 %v59
    %312 = vmatpush.msra.mxu0 %v55
    %313 = vmatpush.msra.mxu0 %v51
    %314 = vmatmul.f32.gmra.mxu0 %v269
    %v315 = vpop.f32.mrf.mxu0
    %v316 = vadd.f32 0.0, %v315
    %317 = vdwg.mxu0
    %318 = vmatpush.msra.mxu0 %v112
    %319 = vmatpush.msra.mxu0 %v108
    %320 = vmatpush.msra.mxu0 %v104
    %321 = vmatpush.msra.mxu0 %v100
    %322 = vmatpush.msra.mxu0 %v96
    %323 = vmatpush.msra.mxu0 %v92
    %324 = vmatpush.msra.mxu0 %v88
    %325 = vmatpush.msra.mxu0 %v84
    %326 = vmatpush.msra.mxu0 %v80
    %327 = vmatpush.msra.mxu0 %v76
    %328 = vmatpush.msra.mxu0 %v72
    %329 = vmatpush.msra.mxu0 %v68
    %330 = vmatpush.msra.mxu0 %v64
    %331 = vmatpush.msra.mxu0 %v60
    %332 = vmatpush.msra.mxu0 %v56
    %333 = vmatpush.msra.mxu0 %v52
    %334 = vmatmul.f32.gmra.mxu0 %v269
    %v335 = vpop.f32.mrf.mxu0
    %v336 = vadd.f32 0.0, %v335
    %337 = vdwg.mxu0
    %338 = vmatpush.msra.mxu0 %v113
    %339 = vmatpush.msra.mxu0 %v109
    %340 = vmatpush.msra.mxu0 %v105
    %341 = vmatpush.msra.mxu0 %v101
    %342 = vmatpush.msra.mxu0 %v97
    %343 = vmatpush.msra.mxu0 %v93
    %344 = vmatpush.msra.mxu0 %v89
    %345 = vmatpush.msra.mxu0 %v85
    %346 = vmatpush.msra.mxu0 %v81
    %347 = vmatpush.msra.mxu0 %v77
    %348 = vmatpush.msra.mxu0 %v73
    %349 = vmatpush.msra.mxu0 %v69
    %350 = vmatpush.msra.mxu0 %v65
    %351 = vmatpush.msra.mxu0 %v61
    %352 = vmatpush.msra.mxu0 %v57
    %353 = vmatpush.msra.mxu0 %v53
    %354 = vmatmul.f32.gmra.mxu0 %v269
    %v355 = vpop.f32.mrf.mxu0
    %v356 = vadd.f32 0.0, %v355
    %357 = vdwg.mxu0
    %v358 = vadd.f32 %v274, %v296
    %v359 = vadd.f32 %v275, %v316
    %v360 = vadd.f32 %v276, %v336
    %v361 = vadd.f32 %v277, %v356
    %v362 = vxor.u32 %v358, 2147483648
    %v363 = vxor.u32 %v359, 2147483648
    %v364 = vxor.u32 %v360, 2147483648
    %v365 = vmul.f32 %v362, 1.442695
    %v366 = vpow.pop %v365
    %v367 = vmul.f32 %v363, 1.442695
    %v368 = vpow.pop %v367
    %v369 = vmul.f32 %v364, 1.442695
    %v370 = vpow.pop %v369
    %v371 = vadd.f32 %v366, 1.0
    %v372 = vadd.f32 %v368, 1.0
    %v373 = vadd.f32 %v370, 1.0
    %v374 = vrcp.pop %v371
    %v375 = vmul.f32 %v371, %v374
    %v376 = vsub.f32 1.0, %v375
    %v377 = vmul.f32 %v374, %v376
    %v378 = vadd.f32 %v374, %v377
    %vm379 = vweird.f32 %v371
    %vm380 = vweird.f32 %v374
    %vm381 = vmor %vm379, %vm380
    %v382 = vsel %vm381, %v374, %v378
    %v383 = vand.u32 2147483647, %v371
    %vm384 = vcmp.eq.f32.partialorder %v383, 8.507059e+37
    %v385 = vand.u32 %v371, 2147483648
    %v386 = vor.u32 1.1754944e-38, %v385
    %v387 = vsel %vm384, %v386, %v382
    %v388 = vmul.f32 1.0, %v387
    %v389 = vrcp.pop %v372
    %v390 = vmul.f32 %v372, %v389
    %v391 = vsub.f32 1.0, %v390
    %v392 = vmul.f32 %v389, %v391
    %v393 = vadd.f32 %v389, %v392
    %vm394 = vweird.f32 %v372
    %vm395 = vweird.f32 %v389
    %vm396 = vmor %vm394, %vm395
    %v397 = vsel %vm396, %v389, %v393
    %v398 = vand.u32 2147483647, %v372
    %vm399 = vcmp.eq.f32.partialorder %v398, 8.507059e+37
    %v400 = vand.u32 %v372, 2147483648
    %v401 = vor.u32 1.1754944e-38, %v400
    %v402 = vsel %vm399, %v401, %v397
    %v403 = vmul.f32 1.0, %v402
    %v404 = vrcp.pop %v373
    %v405 = vmul.f32 %v373, %v404
    %v406 = vsub.f32 1.0, %v405
    %v407 = vmul.f32 %v404, %v406
    %v408 = vadd.f32 %v404, %v407
    %vm409 = vweird.f32 %v373
    %vm410 = vweird.f32 %v404
    %vm411 = vmor %vm409, %vm410
    %v412 = vsel %vm411, %v404, %v408
    %v413 = vand.u32 2147483647, %v373
    %vm414 = vcmp.eq.f32.partialorder %v413, 8.507059e+37
    %v415 = vand.u32 %v373, 2147483648
    %v416 = vor.u32 1.1754944e-38, %v415
    %v417 = vsel %vm414, %v416, %v412
    %v418 = vmul.f32 1.0, %v417
    %v419 = vtanh.pop %v361
    %v420 = vmul.f32 %v403, %v267
    %v421 = vmul.f32 %v388, %v419
    %v422 = vadd.f32 %v420, %v421
    %v423 = vtanh.pop %v422
    %v424 = vmul.f32 %v418, %v423
    %s425 = scalar_lea.vmem [#allocation9], 8
    %426 = vst [vmem:[%s425] sm:$0xff] %v424
    %s427 = smul.u32 2, 4
    %s428 = smul.addr %s427, 8
    %s429 = scalar_lea.vmem [#allocation4], %s428
    %v430 = vld [vmem:[%s429] sm:$0xff]
    %v431 = vld [vmem:[%s429 + $0x8] sm:$0xff]
    %v432 = vld [vmem:[%s429 + $0x10] sm:$0xff]
    %v433 = vld [vmem:[%s429 + $0x18] sm:$0xff]
    %434 = vmatpush.msra.mxu0 %v110
    %435 = vmatpush.msra.mxu0 %v106
    %436 = vmatpush.msra.mxu0 %v102
    %437 = vmatpush.msra.mxu0 %v98
    %438 = vmatpush.msra.mxu0 %v94
    %439 = vmatpush.msra.mxu0 %v90
    %440 = vmatpush.msra.mxu0 %v86
    %441 = vmatpush.msra.mxu0 %v82
    %442 = vmatpush.msra.mxu0 %v78
    %443 = vmatpush.msra.mxu0 %v74
    %444 = vmatpush.msra.mxu0 %v70
    %445 = vmatpush.msra.mxu0 %v66
    %446 = vmatpush.msra.mxu0 %v62
    %447 = vmatpush.msra.mxu0 %v58
    %448 = vmatpush.msra.mxu0 %v54
    %449 = vmatpush.msra.mxu0 %v50
    %450 = vmatmul.f32.gmra.mxu0 %v424
    %v451 = vpop.f32.mrf.mxu0
    %v452 = vadd.f32 0.0, %v451
    %453 = vdwg.mxu0
    %454 = vmatpush.msra.mxu0 %v111
    %455 = vmatpush.msra.mxu0 %v107
    %456 = vmatpush.msra.mxu0 %v103
    %457 = vmatpush.msra.mxu0 %v99
    %458 = vmatpush.msra.mxu0 %v95
    %459 = vmatpush.msra.mxu0 %v91
    %460 = vmatpush.msra.mxu0 %v87
    %461 = vmatpush.msra.mxu0 %v83
    %462 = vmatpush.msra.mxu0 %v79
    %463 = vmatpush.msra.mxu0 %v75
    %464 = vmatpush.msra.mxu0 %v71
    %465 = vmatpush.msra.mxu0 %v67
    %466 = vmatpush.msra.mxu0 %v63
    %467 = vmatpush.msra.mxu0 %v59
    %468 = vmatpush.msra.mxu0 %v55
    %469 = vmatpush.msra.mxu0 %v51
    %470 = vmatmul.f32.gmra.mxu0 %v424
    %v471 = vpop.f32.mrf.mxu0
    %v472 = vadd.f32 0.0, %v471
    %473 = vdwg.mxu0
    %474 = vmatpush.msra.mxu0 %v112
    %475 = vmatpush.msra.mxu0 %v108
    %476 = vmatpush.msra.mxu0 %v104
    %477 = vmatpush.msra.mxu0 %v100
    %478 = vmatpush.msra.mxu0 %v96
    %479 = vmatpush.msra.mxu0 %v92
    %480 = vmatpush.msra.mxu0 %v88
    %481 = vmatpush.msra.mxu0 %v84
    %482 = vmatpush.msra.mxu0 %v80
    %483 = vmatpush.msra.mxu0 %v76
    %484 = vmatpush.msra.mxu0 %v72
    %485 = vmatpush.msra.mxu0 %v68
    %486 = vmatpush.msra.mxu0 %v64
    %487 = vmatpush.msra.mxu0 %v60
    %488 = vmatpush.msra.mxu0 %v56
    %489 = vmatpush.msra.mxu0 %v52
    %490 = vmatmul.f32.gmra.mxu0 %v424
    %v491 = vpop.f32.mrf.mxu0
    %v492 = vadd.f32 0.0, %v491
    %493 = vdwg.mxu0
    %494 = vmatpush.msra.mxu0 %v113
    %495 = vmatpush.msra.mxu0 %v109
    %496 = vmatpush.msra.mxu0 %v105
    %497 = vmatpush.msra.mxu0 %v101
    %498 = vmatpush.msra.mxu0 %v97
    %499 = vmatpush.msra.mxu0 %v93
    %500 = vmatpush.msra.mxu0 %v89
    %501 = vmatpush.msra.mxu0 %v85
    %502 = vmatpush.msra.mxu0 %v81
    %503 = vmatpush.msra.mxu0 %v77
    %504 = vmatpush.msra.mxu0 %v73
    %505 = vmatpush.msra.mxu0 %v69
    %506 = vmatpush.msra.mxu0 %v65
    %507 = vmatpush.msra.mxu0 %v61
    %508 = vmatpush.msra.mxu0 %v57
    %509 = vmatpush.msra.mxu0 %v53
    %510 = vmatmul.f32.gmra.mxu0 %v424
    %v511 = vpop.f32.mrf.mxu0
    %v512 = vadd.f32 0.0, %v511
    %513 = vdwg.mxu0
    %v514 = vadd.f32 %v430, %v452
    %v515 = vadd.f32 %v431, %v472
    %v516 = vadd.f32 %v432, %v492
    %v517 = vadd.f32 %v433, %v512
    %v518 = vxor.u32 %v514, 2147483648
    %v519 = vxor.u32 %v515, 2147483648
    %v520 = vxor.u32 %v516, 2147483648
    %v521 = vmul.f32 %v518, 1.442695
    %v522 = vpow.pop %v521
    %v523 = vmul.f32 %v519, 1.442695
    %v524 = vpow.pop %v523
    %v525 = vmul.f32 %v520, 1.442695
    %v526 = vpow.pop %v525
    %v527 = vadd.f32 %v522, 1.0
    %v528 = vadd.f32 %v524, 1.0
    %v529 = vadd.f32 %v526, 1.0
    %v530 = vrcp.pop %v527
    %v531 = vmul.f32 %v527, %v530
    %v532 = vsub.f32 1.0, %v531
    %v533 = vmul.f32 %v530, %v532
    %v534 = vadd.f32 %v530, %v533
    %vm535 = vweird.f32 %v527
    %vm536 = vweird.f32 %v530
    %vm537 = vmor %vm535, %vm536
    %v538 = vsel %vm537, %v530, %v534
    %v539 = vand.u32 2147483647, %v527
    %vm540 = vcmp.eq.f32.partialorder %v539, 8.507059e+37
    %v541 = vand.u32 %v527, 2147483648
    %v542 = vor.u32 1.1754944e-38, %v541
    %v543 = vsel %vm540, %v542, %v538
    %v544 = vmul.f32 1.0, %v543
    %v545 = vrcp.pop %v528
    %v546 = vmul.f32 %v528, %v545
    %v547 = vsub.f32 1.0, %v546
    %v548 = vmul.f32 %v545, %v547
    %v549 = vadd.f32 %v545, %v548
    %vm550 = vweird.f32 %v528
    %vm551 = vweird.f32 %v545
    %vm552 = vmor %vm550, %vm551
    %v553 = vsel %vm552, %v545, %v549
    %v554 = vand.u32 2147483647, %v528
    %vm555 = vcmp.eq.f32.partialorder %v554, 8.507059e+37
    %v556 = vand.u32 %v528, 2147483648
    %v557 = vor.u32 1.1754944e-38, %v556
    %v558 = vsel %vm555, %v557, %v553
    %v559 = vmul.f32 1.0, %v558
    %v560 = vrcp.pop %v529
    %v561 = vmul.f32 %v529, %v560
    %v562 = vsub.f32 1.0, %v561
    %v563 = vmul.f32 %v560, %v562
    %v564 = vadd.f32 %v560, %v563
    %vm565 = vweird.f32 %v529
    %vm566 = vweird.f32 %v560
    %vm567 = vmor %vm565, %vm566
    %v568 = vsel %vm567, %v560, %v564
    %v569 = vand.u32 2147483647, %v529
    %vm570 = vcmp.eq.f32.partialorder %v569, 8.507059e+37
    %v571 = vand.u32 %v529, 2147483648
    %v572 = vor.u32 1.1754944e-38, %v571
    %v573 = vsel %vm570, %v572, %v568
    %v574 = vmul.f32 1.0, %v573
    %v575 = vtanh.pop %v517
    %v576 = vmul.f32 %v559, %v422
    %v577 = vmul.f32 %v544, %v575
    %v578 = vadd.f32 %v576, %v577
    %v579 = vtanh.pop %v578
    %v580 = vmul.f32 %v574, %v579
    %s581 = scalar_lea.vmem [#allocation9], 16
    %582 = vst [vmem:[%s581] sm:$0xff] %v580
    %s583 = smul.u32 3, 4
    %s584 = smul.addr %s583, 8
    %s585 = scalar_lea.vmem [#allocation4], %s584
    %v586 = vld [vmem:[%s585] sm:$0xff]
    %v587 = vld [vmem:[%s585 + $0x8] sm:$0xff]
    %v588 = vld [vmem:[%s585 + $0x10] sm:$0xff]
    %v589 = vld [vmem:[%s585 + $0x18] sm:$0xff]
    %590 = vmatpush.msra.mxu0 %v110
    %591 = vmatpush.msra.mxu0 %v106
    %592 = vmatpush.msra.mxu0 %v102
    %593 = vmatpush.msra.mxu0 %v98
    %594 = vmatpush.msra.mxu0 %v94
    %595 = vmatpush.msra.mxu0 %v90
    %596 = vmatpush.msra.mxu0 %v86
    %597 = vmatpush.msra.mxu0 %v82
    %598 = vmatpush.msra.mxu0 %v78
    %599 = vmatpush.msra.mxu0 %v74
    %600 = vmatpush.msra.mxu0 %v70
    %601 = vmatpush.msra.mxu0 %v66
    %602 = vmatpush.msra.mxu0 %v62
    %603 = vmatpush.msra.mxu0 %v58
    %604 = vmatpush.msra.mxu0 %v54
    %605 = vmatpush.msra.mxu0 %v50
    %606 = vmatmul.f32.gmra.mxu0 %v580
    %v607 = vpop.f32.mrf.mxu0
    %v608 = vadd.f32 0.0, %v607
    %609 = vdwg.mxu0
    %610 = vmatpush.msra.mxu0 %v111
    %611 = vmatpush.msra.mxu0 %v107
    %612 = vmatpush.msra.mxu0 %v103
    %613 = vmatpush.msra.mxu0 %v99
    %614 = vmatpush.msra.mxu0 %v95
    %615 = vmatpush.msra.mxu0 %v91
    %616 = vmatpush.msra.mxu0 %v87
    %617 = vmatpush.msra.mxu0 %v83
    %618 = vmatpush.msra.mxu0 %v79
    %619 = vmatpush.msra.mxu0 %v75
    %620 = vmatpush.msra.mxu0 %v71
    %621 = vmatpush.msra.mxu0 %v67
    %622 = vmatpush.msra.mxu0 %v63
    %623 = vmatpush.msra.mxu0 %v59
    %624 = vmatpush.msra.mxu0 %v55
    %625 = vmatpush.msra.mxu0 %v51
    %626 = vmatmul.f32.gmra.mxu0 %v580
    %v627 = vpop.f32.mrf.mxu0
    %v628 = vadd.f32 0.0, %v627
    %629 = vdwg.mxu0
    %630 = vmatpush.msra.mxu0 %v112
    %631 = vmatpush.msra.mxu0 %v108
    %632 = vmatpush.msra.mxu0 %v104
    %633 = vmatpush.msra.mxu0 %v100
    %634 = vmatpush.msra.mxu0 %v96
    %635 = vmatpush.msra.mxu0 %v92
    %636 = vmatpush.msra.mxu0 %v88
    %637 = vmatpush.msra.mxu0 %v84
    %638 = vmatpush.msra.mxu0 %v80
    %639 = vmatpush.msra.mxu0 %v76
    %640 = vmatpush.msra.mxu0 %v72
    %641 = vmatpush.msra.mxu0 %v68
    %642 = vmatpush.msra.mxu0 %v64
    %643 = vmatpush.msra.mxu0 %v60
    %644 = vmatpush.msra.mxu0 %v56
    %645 = vmatpush.msra.mxu0 %v52
    %646 = vmatmul.f32.gmra.mxu0 %v580
    %v647 = vpop.f32.mrf.mxu0
    %v648 = vadd.f32 0.0, %v647
    %649 = vdwg.mxu0
    %650 = vmatpush.msra.mxu0 %v113
    %651 = vmatpush.msra.mxu0 %v109
    %652 = vmatpush.msra.mxu0 %v105
    %653 = vmatpush.msra.mxu0 %v101
    %654 = vmatpush.msra.mxu0 %v97
    %655 = vmatpush.msra.mxu0 %v93
    %656 = vmatpush.msra.mxu0 %v89
    %657 = vmatpush.msra.mxu0 %v85
    %658 = vmatpush.msra.mxu0 %v81
    %659 = vmatpush.msra.mxu0 %v77
    %660 = vmatpush.msra.mxu0 %v73
    %661 = vmatpush.msra.mxu0 %v69
    %662 = vmatpush.msra.mxu0 %v65
    %663 = vmatpush.msra.mxu0 %v61
    %664 = vmatpush.msra.mxu0 %v57
    %665 = vmatpush.msra.mxu0 %v53
    %666 = vmatmul.f32.gmra.mxu0 %v580
    %v667 = vpop.f32.mrf.mxu0
    %v668 = vadd.f32 0.0, %v667
    %669 = vdwg.mxu0
    %v670 = vadd.f32 %v586, %v608
    %v671 = vadd.f32 %v587, %v628
    %v672 = vadd.f32 %v588, %v648
    %v673 = vadd.f32 %v589, %v668
    %v674 = vxor.u32 %v670, 2147483648
    %v675 = vxor.u32 %v671, 2147483648
    %v676 = vxor.u32 %v672, 2147483648
    %v677 = vmul.f32 %v674, 1.442695
    %v678 = vpow.pop %v677
    %v679 = vmul.f32 %v675, 1.442695
    %v680 = vpow.pop %v679
    %v681 = vmul.f32 %v676, 1.442695
    %v682 = vpow.pop %v681
    %v683 = vadd.f32 %v678, 1.0
    %v684 = vadd.f32 %v680, 1.0
    %v685 = vadd.f32 %v682, 1.0
    %v686 = vrcp.pop %v683
    %v687 = vmul.f32 %v683, %v686
    %v688 = vsub.f32 1.0, %v687
    %v689 = vmul.f32 %v686, %v688
    %v690 = vadd.f32 %v686, %v689
    %vm691 = vweird.f32 %v683
    %vm692 = vweird.f32 %v686
    %vm693 = vmor %vm691, %vm692
    %v694 = vsel %vm693, %v686, %v690
    %v695 = vand.u32 2147483647, %v683
    %vm696 = vcmp.eq.f32.partialorder %v695, 8.507059e+37
    %v697 = vand.u32 %v683, 2147483648
    %v698 = vor.u32 1.1754944e-38, %v697
    %v699 = vsel %vm696, %v698, %v694
    %v700 = vmul.f32 1.0, %v699
    %v701 = vrcp.pop %v684
    %v702 = vmul.f32 %v684, %v701
    %v703 = vsub.f32 1.0, %v702
    %v704 = vmul.f32 %v701, %v703
    %v705 = vadd.f32 %v701, %v704
    %vm706 = vweird.f32 %v684
    %vm707 = vweird.f32 %v701
    %vm708 = vmor %vm706, %vm707
    %v709 = vsel %vm708, %v701, %v705
    %v710 = vand.u32 2147483647, %v684
    %vm711 = vcmp.eq.f32.partialorder %v710, 8.507059e+37
    %v712 = vand.u32 %v684, 2147483648
    %v713 = vor.u32 1.1754944e-38, %v712
    %v714 = vsel %vm711, %v713, %v709
    %v715 = vmul.f32 1.0, %v714
    %v716 = vrcp.pop %v685
    %v717 = vmul.f32 %v685, %v716
    %v718 = vsub.f32 1.0, %v717
    %v719 = vmul.f32 %v716, %v718
    %v720 = vadd.f32 %v716, %v719
    %vm721 = vweird.f32 %v685
    %vm722 = vweird.f32 %v716
    %vm723 = vmor %vm721, %vm722
    %v724 = vsel %vm723, %v716, %v720
    %v725 = vand.u32 2147483647, %v685
    %vm726 = vcmp.eq.f32.partialorder %v725, 8.507059e+37
    %v727 = vand.u32 %v685, 2147483648
    %v728 = vor.u32 1.1754944e-38, %v727
    %v729 = vsel %vm726, %v728, %v724
    %v730 = vmul.f32 1.0, %v729
    %v731 = vtanh.pop %v673
    %v732 = vmul.f32 %v715, %v578
    %v733 = vmul.f32 %v700, %v731
    %v734 = vadd.f32 %v732, %v733
    %v735 = vtanh.pop %v734
    %v736 = vmul.f32 %v730, %v735
    %s737 = scalar_lea.vmem [#allocation9], 24
    %738 = vst [vmem:[%s737] sm:$0xff] %v736
    %s739 = smul.u32 4, 4
    %s740 = smul.addr %s739, 8
    %s741 = scalar_lea.vmem [#allocation4], %s740
    %v742 = vld [vmem:[%s741] sm:$0xff]
    %v743 = vld [vmem:[%s741 + $0x8] sm:$0xff]
    %v744 = vld [vmem:[%s741 + $0x10] sm:$0xff]
    %v745 = vld [vmem:[%s741 + $0x18] sm:$0xff]
    %746 = vmatpush.msra.mxu0 %v110
    %747 = vmatpush.msra.mxu0 %v106
    %748 = vmatpush.msra.mxu0 %v102
    %749 = vmatpush.msra.mxu0 %v98
    %750 = vmatpush.msra.mxu0 %v94
    %751 = vmatpush.msra.mxu0 %v90
    %752 = vmatpush.msra.mxu0 %v86
    %753 = vmatpush.msra.mxu0 %v82
    %754 = vmatpush.msra.mxu0 %v78
    %755 = vmatpush.msra.mxu0 %v74
    %756 = vmatpush.msra.mxu0 %v70
    %757 = vmatpush.msra.mxu0 %v66
    %758 = vmatpush.msra.mxu0 %v62
    %759 = vmatpush.msra.mxu0 %v58
    %760 = vmatpush.msra.mxu0 %v54
    %761 = vmatpush.msra.mxu0 %v50
    %762 = vmatmul.f32.gmra.mxu0 %v736
    %v763 = vpop.f32.mrf.mxu0
    %v764 = vadd.f32 0.0, %v763
    %765 = vdwg.mxu0
    %766 = vmatpush.msra.mxu0 %v111
    %767 = vmatpush.msra.mxu0 %v107
    %768 = vmatpush.msra.mxu0 %v103
    %769 = vmatpush.msra.mxu0 %v99
    %770 = vmatpush.msra.mxu0 %v95
    %771 = vmatpush.msra.mxu0 %v91
    %772 = vmatpush.msra.mxu0 %v87
    %773 = vmatpush.msra.mxu0 %v83
    %774 = vmatpush.msra.mxu0 %v79
    %775 = vmatpush.msra.mxu0 %v75
    %776 = vmatpush.msra.mxu0 %v71
    %777 = vmatpush.msra.mxu0 %v67
    %778 = vmatpush.msra.mxu0 %v63
    %779 = vmatpush.msra.mxu0 %v59
    %780 = vmatpush.msra.mxu0 %v55
    %781 = vmatpush.msra.mxu0 %v51
    %782 = vmatmul.f32.gmra.mxu0 %v736
    %v783 = vpop.f32.mrf.mxu0
    %v784 = vadd.f32 0.0, %v783
    %785 = vdwg.mxu0
    %786 = vmatpush.msra.mxu0 %v112
    %787 = vmatpush.msra.mxu0 %v108
    %788 = vmatpush.msra.mxu0 %v104
    %789 = vmatpush.msra.mxu0 %v100
    %790 = vmatpush.msra.mxu0 %v96
    %791 = vmatpush.msra.mxu0 %v92
    %792 = vmatpush.msra.mxu0 %v88
    %793 = vmatpush.msra.mxu0 %v84
    %794 = vmatpush.msra.mxu0 %v80
    %795 = vmatpush.msra.mxu0 %v76
    %796 = vmatpush.msra.mxu0 %v72
    %797 = vmatpush.msra.mxu0 %v68
    %798 = vmatpush.msra.mxu0 %v64
    %799 = vmatpush.msra.mxu0 %v60
    %800 = vmatpush.msra.mxu0 %v56
    %801 = vmatpush.msra.mxu0 %v52
    %802 = vmatmul.f32.gmra.mxu0 %v736
    %v803 = vpop.f32.mrf.mxu0
    %v804 = vadd.f32 0.0, %v803
    %805 = vdwg.mxu0
    %806 = vmatpush.msra.mxu0 %v113
    %807 = vmatpush.msra.mxu0 %v109
    %808 = vmatpush.msra.mxu0 %v105
    %809 = vmatpush.msra.mxu0 %v101
    %810 = vmatpush.msra.mxu0 %v97
    %811 = vmatpush.msra.mxu0 %v93
    %812 = vmatpush.msra.mxu0 %v89
    %813 = vmatpush.msra.mxu0 %v85
    %814 = vmatpush.msra.mxu0 %v81
    %815 = vmatpush.msra.mxu0 %v77
    %816 = vmatpush.msra.mxu0 %v73
    %817 = vmatpush.msra.mxu0 %v69
    %818 = vmatpush.msra.mxu0 %v65
    %819 = vmatpush.msra.mxu0 %v61
    %820 = vmatpush.msra.mxu0 %v57
    %821 = vmatpush.msra.mxu0 %v53
    %822 = vmatmul.f32.gmra.mxu0 %v736
    %v823 = vpop.f32.mrf.mxu0
    %v824 = vadd.f32 0.0, %v823
    %825 = vdwg.mxu0
    %v826 = vadd.f32 %v742, %v764
    %v827 = vadd.f32 %v743, %v784
    %v828 = vadd.f32 %v744, %v804
    %v829 = vadd.f32 %v745, %v824
    %v830 = vxor.u32 %v826, 2147483648
    %v831 = vxor.u32 %v827, 2147483648
    %v832 = vxor.u32 %v828, 2147483648
    %v833 = vmul.f32 %v830, 1.442695
    %v834 = vpow.pop %v833
    %v835 = vmul.f32 %v831, 1.442695
    %v836 = vpow.pop %v835
    %v837 = vmul.f32 %v832, 1.442695
    %v838 = vpow.pop %v837
    %v839 = vadd.f32 %v834, 1.0
    %v840 = vadd.f32 %v836, 1.0
    %v841 = vadd.f32 %v838, 1.0
    %v842 = vrcp.pop %v839
    %v843 = vmul.f32 %v839, %v842
    %v844 = vsub.f32 1.0, %v843
    %v845 = vmul.f32 %v842, %v844
    %v846 = vadd.f32 %v842, %v845
    %vm847 = vweird.f32 %v839
    %vm848 = vweird.f32 %v842
    %vm849 = vmor %vm847, %vm848
    %v850 = vsel %vm849, %v842, %v846
    %v851 = vand.u32 2147483647, %v839
    %vm852 = vcmp.eq.f32.partialorder %v851, 8.507059e+37
    %v853 = vand.u32 %v839, 2147483648
    %v854 = vor.u32 1.1754944e-38, %v853
    %v855 = vsel %vm852, %v854, %v850
    %v856 = vmul.f32 1.0, %v855
    %v857 = vrcp.pop %v840
    %v858 = vmul.f32 %v840, %v857
    %v859 = vsub.f32 1.0, %v858
    %v860 = vmul.f32 %v857, %v859
    %v861 = vadd.f32 %v857, %v860
    %vm862 = vweird.f32 %v840
    %vm863 = vweird.f32 %v857
    %vm864 = vmor %vm862, %vm863
    %v865 = vsel %vm864, %v857, %v861
    %v866 = vand.u32 2147483647, %v840
    %vm867 = vcmp.eq.f32.partialorder %v866, 8.507059e+37
    %v868 = vand.u32 %v840, 2147483648
    %v869 = vor.u32 1.1754944e-38, %v868
    %v870 = vsel %vm867, %v869, %v865
    %v871 = vmul.f32 1.0, %v870
    %v872 = vrcp.pop %v841
    %v873 = vmul.f32 %v841, %v872
    %v874 = vsub.f32 1.0, %v873
    %v875 = vmul.f32 %v872, %v874
    %v876 = vadd.f32 %v872, %v875
    %vm877 = vweird.f32 %v841
    %vm878 = vweird.f32 %v872
    %vm879 = vmor %vm877, %vm878
    %v880 = vsel %vm879, %v872, %v876
    %v881 = vand.u32 2147483647, %v841
    %vm882 = vcmp.eq.f32.partialorder %v881, 8.507059e+37
    %v883 = vand.u32 %v841, 2147483648
    %v884 = vor.u32 1.1754944e-38, %v883
    %v885 = vsel %vm882, %v884, %v880
    %v886 = vmul.f32 1.0, %v885
    %v887 = vtanh.pop %v829
    %v888 = vmul.f32 %v871, %v734
    %v889 = vmul.f32 %v856, %v887
    %v890 = vadd.f32 %v888, %v889
    %v891 = vtanh.pop %v890
    %v892 = vmul.f32 %v886, %v891
    %s893 = scalar_lea.vmem [#allocation9], 32
    %894 = vst [vmem:[%s893] sm:$0xff] %v892
    %s895 = smul.u32 5, 4
    %s896 = smul.addr %s895, 8
    %s897 = scalar_lea.vmem [#allocation4], %s896
    %v898 = vld [vmem:[%s897] sm:$0xff]
    %v899 = vld [vmem:[%s897 + $0x8] sm:$0xff]
    %v900 = vld [vmem:[%s897 + $0x10] sm:$0xff]
    %v901 = vld [vmem:[%s897 + $0x18] sm:$0xff]
    %902 = vmatpush.msra.mxu0 %v110
    %903 = vmatpush.msra.mxu0 %v106
    %904 = vmatpush.msra.mxu0 %v102
    %905 = vmatpush.msra.mxu0 %v98
    %906 = vmatpush.msra.mxu0 %v94
    %907 = vmatpush.msra.mxu0 %v90
    %908 = vmatpush.msra.mxu0 %v86
    %909 = vmatpush.msra.mxu0 %v82
    %910 = vmatpush.msra.mxu0 %v78
    %911 = vmatpush.msra.mxu0 %v74
    %912 = vmatpush.msra.mxu0 %v70
    %913 = vmatpush.msra.mxu0 %v66
    %914 = vmatpush.msra.mxu0 %v62
    %915 = vmatpush.msra.mxu0 %v58
    %916 = vmatpush.msra.mxu0 %v54
    %917 = vmatpush.msra.mxu0 %v50
    %918 = vmatmul.f32.gmra.mxu0 %v892
    %v919 = vpop.f32.mrf.mxu0
    %v920 = vadd.f32 0.0, %v919
    %921 = vdwg.mxu0
    %922 = vmatpush.msra.mxu0 %v111
    %923 = vmatpush.msra.mxu0 %v107
    %924 = vmatpush.msra.mxu0 %v103
    %925 = vmatpush.msra.mxu0 %v99
    %926 = vmatpush.msra.mxu0 %v95
    %927 = vmatpush.msra.mxu0 %v91
    %928 = vmatpush.msra.mxu0 %v87
    %929 = vmatpush.msra.mxu0 %v83
    %930 = vmatpush.msra.mxu0 %v79
    %931 = vmatpush.msra.mxu0 %v75
    %932 = vmatpush.msra.mxu0 %v71
    %933 = vmatpush.msra.mxu0 %v67
    %934 = vmatpush.msra.mxu0 %v63
    %935 = vmatpush.msra.mxu0 %v59
    %936 = vmatpush.msra.mxu0 %v55
    %937 = vmatpush.msra.mxu0 %v51
    %938 = vmatmul.f32.gmra.mxu0 %v892
    %v939 = vpop.f32.mrf.mxu0
    %v940 = vadd.f32 0.0, %v939
    %941 = vdwg.mxu0
    %942 = vmatpush.msra.mxu0 %v112
    %943 = vmatpush.msra.mxu0 %v108
    %944 = vmatpush.msra.mxu0 %v104
    %945 = vmatpush.msra.mxu0 %v100
    %946 = vmatpush.msra.mxu0 %v96
    %947 = vmatpush.msra.mxu0 %v92
    %948 = vmatpush.msra.mxu0 %v88
    %949 = vmatpush.msra.mxu0 %v84
    %950 = vmatpush.msra.mxu0 %v80
    %951 = vmatpush.msra.mxu0 %v76
    %952 = vmatpush.msra.mxu0 %v72
    %953 = vmatpush.msra.mxu0 %v68
    %954 = vmatpush.msra.mxu0 %v64
    %955 = vmatpush.msra.mxu0 %v60
    %956 = vmatpush.msra.mxu0 %v56
    %957 = vmatpush.msra.mxu0 %v52
    %958 = vmatmul.f32.gmra.mxu0 %v892
    %v959 = vpop.f32.mrf.mxu0
    %v960 = vadd.f32 0.0, %v959
    %961 = vdwg.mxu0
    %962 = vmatpush.msra.mxu0 %v113
    %963 = vmatpush.msra.mxu0 %v109
    %964 = vmatpush.msra.mxu0 %v105
    %965 = vmatpush.msra.mxu0 %v101
    %966 = vmatpush.msra.mxu0 %v97
    %967 = vmatpush.msra.mxu0 %v93
    %968 = vmatpush.msra.mxu0 %v89
    %969 = vmatpush.msra.mxu0 %v85
    %970 = vmatpush.msra.mxu0 %v81
    %971 = vmatpush.msra.mxu0 %v77
    %972 = vmatpush.msra.mxu0 %v73
    %973 = vmatpush.msra.mxu0 %v69
    %974 = vmatpush.msra.mxu0 %v65
    %975 = vmatpush.msra.mxu0 %v61
    %976 = vmatpush.msra.mxu0 %v57
    %977 = vmatpush.msra.mxu0 %v53
    %978 = vmatmul.f32.gmra.mxu0 %v892
    %v979 = vpop.f32.mrf.mxu0
    %v980 = vadd.f32 0.0, %v979
    %981 = vdwg.mxu0
    %v982 = vadd.f32 %v898, %v920
    %v983 = vadd.f32 %v899, %v940
    %v984 = vadd.f32 %v900, %v960
    %v985 = vadd.f32 %v901, %v980
    %v986 = vxor.u32 %v982, 2147483648
    %v987 = vxor.u32 %v983, 2147483648
    %v988 = vxor.u32 %v984, 2147483648
    %v989 = vmul.f32 %v986, 1.442695
    %v990 = vpow.pop %v989
    %v991 = vmul.f32 %v987, 1.442695
    %v992 = vpow.pop %v991
    %v993 = vmul.f32 %v988, 1.442695
    %v994 = vpow.pop %v993
    %v995 = vadd.f32 %v990, 1.0
    %v996 = vadd.f32 %v992, 1.0
    %v997 = vadd.f32 %v994, 1.0
    %v998 = vrcp.pop %v995
    %v999 = vmul.f32 %v995, %v998
    %v1000 = vsub.f32 1.0, %v999
    %v1001 = vmul.f32 %v998, %v1000
    %v1002 = vadd.f32 %v998, %v1001
    %vm1003 = vweird.f32 %v995
    %vm1004 = vweird.f32 %v998
    %vm1005 = vmor %vm1003, %vm1004
    %v1006 = vsel %vm1005, %v998, %v1002
    %v1007 = vand.u32 2147483647, %v995
    %vm1008 = vcmp.eq.f32.partialorder %v1007, 8.507059e+37
    %v1009 = vand.u32 %v995, 2147483648
    %v1010 = vor.u32 1.1754944e-38, %v1009
    %v1011 = vsel %vm1008, %v1010, %v1006
    %v1012 = vmul.f32 1.0, %v1011
    %v1013 = vrcp.pop %v996
    %v1014 = vmul.f32 %v996, %v1013
    %v1015 = vsub.f32 1.0, %v1014
    %v1016 = vmul.f32 %v1013, %v1015
    %v1017 = vadd.f32 %v1013, %v1016
    %vm1018 = vweird.f32 %v996
    %vm1019 = vweird.f32 %v1013
    %vm1020 = vmor %vm1018, %vm1019
    %v1021 = vsel %vm1020, %v1013, %v1017
    %v1022 = vand.u32 2147483647, %v996
    %vm1023 = vcmp.eq.f32.partialorder %v1022, 8.507059e+37
    %v1024 = vand.u32 %v996, 2147483648
    %v1025 = vor.u32 1.1754944e-38, %v1024
    %v1026 = vsel %vm1023, %v1025, %v1021
    %v1027 = vmul.f32 1.0, %v1026
    %v1028 = vrcp.pop %v997
    %v1029 = vmul.f32 %v997, %v1028
    %v1030 = vsub.f32 1.0, %v1029
    %v1031 = vmul.f32 %v1028, %v1030
    %v1032 = vadd.f32 %v1028, %v1031
    %vm1033 = vweird.f32 %v997
    %vm1034 = vweird.f32 %v1028
    %vm1035 = vmor %vm1033, %vm1034
    %v1036 = vsel %vm1035, %v1028, %v1032
    %v1037 = vand.u32 2147483647, %v997
    %vm1038 = vcmp.eq.f32.partialorder %v1037, 8.507059e+37
    %v1039 = vand.u32 %v997, 2147483648
    %v1040 = vor.u32 1.1754944e-38, %v1039
    %v1041 = vsel %vm1038, %v1040, %v1036
    %v1042 = vmul.f32 1.0, %v1041
    %v1043 = vtanh.pop %v985
    %v1044 = vmul.f32 %v1027, %v890
    %v1045 = vmul.f32 %v1012, %v1043
    %v1046 = vadd.f32 %v1044, %v1045
    %v1047 = vtanh.pop %v1046
    %v1048 = vmul.f32 %v1042, %v1047
    %s1049 = scalar_lea.vmem [#allocation9], 40
    %1050 = vst [vmem:[%s1049] sm:$0xff] %v1048
    %s1051 = smul.u32 6, 4
    %s1052 = smul.addr %s1051, 8
    %s1053 = scalar_lea.vmem [#allocation4], %s1052
    %v1054 = vld [vmem:[%s1053] sm:$0xff]
    %v1055 = vld [vmem:[%s1053 + $0x8] sm:$0xff]
    %v1056 = vld [vmem:[%s1053 + $0x10] sm:$0xff]
    %v1057 = vld [vmem:[%s1053 + $0x18] sm:$0xff]
    %1058 = vmatpush.msra.mxu0 %v110
    %1059 = vmatpush.msra.mxu0 %v106
    %1060 = vmatpush.msra.mxu0 %v102
    %1061 = vmatpush.msra.mxu0 %v98
    %1062 = vmatpush.msra.mxu0 %v94
    %1063 = vmatpush.msra.mxu0 %v90
    %1064 = vmatpush.msra.mxu0 %v86
    %1065 = vmatpush.msra.mxu0 %v82
    %1066 = vmatpush.msra.mxu0 %v78
    %1067 = vmatpush.msra.mxu0 %v74
    %1068 = vmatpush.msra.mxu0 %v70
    %1069 = vmatpush.msra.mxu0 %v66
    %1070 = vmatpush.msra.mxu0 %v62
    %1071 = vmatpush.msra.mxu0 %v58
    %1072 = vmatpush.msra.mxu0 %v54
    %1073 = vmatpush.msra.mxu0 %v50
    %1074 = vmatmul.f32.gmra.mxu0 %v1048
    %v1075 = vpop.f32.mrf.mxu0
    %v1076 = vadd.f32 0.0, %v1075
    %1077 = vdwg.mxu0
    %1078 = vmatpush.msra.mxu0 %v111
    %1079 = vmatpush.msra.mxu0 %v107
    %1080 = vmatpush.msra.mxu0 %v103
    %1081 = vmatpush.msra.mxu0 %v99
    %1082 = vmatpush.msra.mxu0 %v95
    %1083 = vmatpush.msra.mxu0 %v91
    %1084 = vmatpush.msra.mxu0 %v87
    %1085 = vmatpush.msra.mxu0 %v83
    %1086 = vmatpush.msra.mxu0 %v79
    %1087 = vmatpush.msra.mxu0 %v75
    %1088 = vmatpush.msra.mxu0 %v71
    %1089 = vmatpush.msra.mxu0 %v67
    %1090 = vmatpush.msra.mxu0 %v63
    %1091 = vmatpush.msra.mxu0 %v59
    %1092 = vmatpush.msra.mxu0 %v55
    %1093 = vmatpush.msra.mxu0 %v51
    %1094 = vmatmul.f32.gmra.mxu0 %v1048
    %v1095 = vpop.f32.mrf.mxu0
    %v1096 = vadd.f32 0.0, %v1095
    %1097 = vdwg.mxu0
    %1098 = vmatpush.msra.mxu0 %v112
    %1099 = vmatpush.msra.mxu0 %v108
    %1100 = vmatpush.msra.mxu0 %v104
    %1101 = vmatpush.msra.mxu0 %v100
    %1102 = vmatpush.msra.mxu0 %v96
    %1103 = vmatpush.msra.mxu0 %v92
    %1104 = vmatpush.msra.mxu0 %v88
    %1105 = vmatpush.msra.mxu0 %v84
    %1106 = vmatpush.msra.mxu0 %v80
    %1107 = vmatpush.msra.mxu0 %v76
    %1108 = vmatpush.msra.mxu0 %v72
    %1109 = vmatpush.msra.mxu0 %v68
    %1110 = vmatpush.msra.mxu0 %v64
    %1111 = vmatpush.msra.mxu0 %v60
    %1112 = vmatpush.msra.mxu0 %v56
    %1113 = vmatpush.msra.mxu0 %v52
    %1114 = vmatmul.f32.gmra.mxu0 %v1048
    %v1115 = vpop.f32.mrf.mxu0
    %v1116 = vadd.f32 0.0, %v1115
    %1117 = vdwg.mxu0
    %1118 = vmatpush.msra.mxu0 %v113
    %1119 = vmatpush.msra.mxu0 %v109
    %1120 = vmatpush.msra.mxu0 %v105
    %1121 = vmatpush.msra.mxu0 %v101
    %1122 = vmatpush.msra.mxu0 %v97
    %1123 = vmatpush.msra.mxu0 %v93
    %1124 = vmatpush.msra.mxu0 %v89
    %1125 = vmatpush.msra.mxu0 %v85
    %1126 = vmatpush.msra.mxu0 %v81
    %1127 = vmatpush.msra.mxu0 %v77
    %1128 = vmatpush.msra.mxu0 %v73
    %1129 = vmatpush.msra.mxu0 %v69
    %1130 = vmatpush.msra.mxu0 %v65
    %1131 = vmatpush.msra.mxu0 %v61
    %1132 = vmatpush.msra.mxu0 %v57
    %1133 = vmatpush.msra.mxu0 %v53
    %1134 = vmatmul.f32.gmra.mxu0 %v1048
    %v1135 = vpop.f32.mrf.mxu0
    %v1136 = vadd.f32 0.0, %v1135
    %1137 = vdwg.mxu0
    %v1138 = vadd.f32 %v1054, %v1076
    %v1139 = vadd.f32 %v1055, %v1096
    %v1140 = vadd.f32 %v1056, %v1116
    %v1141 = vadd.f32 %v1057, %v1136
    %v1142 = vxor.u32 %v1138, 2147483648
    %v1143 = vxor.u32 %v1139, 2147483648
    %v1144 = vxor.u32 %v1140, 2147483648
    %v1145 = vmul.f32 %v1142, 1.442695
    %v1146 = vpow.pop %v1145
    %v1147 = vmul.f32 %v1143, 1.442695
    %v1148 = vpow.pop %v1147
    %v1149 = vmul.f32 %v1144, 1.442695
    %v1150 = vpow.pop %v1149
    %v1151 = vadd.f32 %v1146, 1.0
    %v1152 = vadd.f32 %v1148, 1.0
    %v1153 = vadd.f32 %v1150, 1.0
    %v1154 = vrcp.pop %v1151
    %v1155 = vmul.f32 %v1151, %v1154
    %v1156 = vsub.f32 1.0, %v1155
    %v1157 = vmul.f32 %v1154, %v1156
    %v1158 = vadd.f32 %v1154, %v1157
    %vm1159 = vweird.f32 %v1151
    %vm1160 = vweird.f32 %v1154
    %vm1161 = vmor %vm1159, %vm1160
    %v1162 = vsel %vm1161, %v1154, %v1158
    %v1163 = vand.u32 2147483647, %v1151
    %vm1164 = vcmp.eq.f32.partialorder %v1163, 8.507059e+37
    %v1165 = vand.u32 %v1151, 2147483648
    %v1166 = vor.u32 1.1754944e-38, %v1165
    %v1167 = vsel %vm1164, %v1166, %v1162
    %v1168 = vmul.f32 1.0, %v1167
    %v1169 = vrcp.pop %v1152
    %v1170 = vmul.f32 %v1152, %v1169
    %v1171 = vsub.f32 1.0, %v1170
    %v1172 = vmul.f32 %v1169, %v1171
    %v1173 = vadd.f32 %v1169, %v1172
    %vm1174 = vweird.f32 %v1152
    %vm1175 = vweird.f32 %v1169
    %vm1176 = vmor %vm1174, %vm1175
    %v1177 = vsel %vm1176, %v1169, %v1173
    %v1178 = vand.u32 2147483647, %v1152
    %vm1179 = vcmp.eq.f32.partialorder %v1178, 8.507059e+37
    %v1180 = vand.u32 %v1152, 2147483648
    %v1181 = vor.u32 1.1754944e-38, %v1180
    %v1182 = vsel %vm1179, %v1181, %v1177
    %v1183 = vmul.f32 1.0, %v1182
    %v1184 = vrcp.pop %v1153
    %v1185 = vmul.f32 %v1153, %v1184
    %v1186 = vsub.f32 1.0, %v1185
    %v1187 = vmul.f32 %v1184, %v1186
    %v1188 = vadd.f32 %v1184, %v1187
    %vm1189 = vweird.f32 %v1153
    %vm1190 = vweird.f32 %v1184
    %vm1191 = vmor %vm1189, %vm1190
    %v1192 = vsel %vm1191, %v1184, %v1188
    %v1193 = vand.u32 2147483647, %v1153
    %vm1194 = vcmp.eq.f32.partialorder %v1193, 8.507059e+37
    %v1195 = vand.u32 %v1153, 2147483648
    %v1196 = vor.u32 1.1754944e-38, %v1195
    %v1197 = vsel %vm1194, %v1196, %v1192
    %v1198 = vmul.f32 1.0, %v1197
    %v1199 = vtanh.pop %v1141
    %v1200 = vmul.f32 %v1183, %v1046
    %v1201 = vmul.f32 %v1168, %v1199
    %v1202 = vadd.f32 %v1200, %v1201
    %v1203 = vtanh.pop %v1202
    %v1204 = vmul.f32 %v1198, %v1203
    %s1205 = scalar_lea.vmem [#allocation9], 48
    %1206 = vst [vmem:[%s1205] sm:$0xff] %v1204
    %s1207 = smul.u32 7, 4
    %s1208 = smul.addr %s1207, 8
    %s1209 = scalar_lea.vmem [#allocation4], %s1208
    %v1210 = vld [vmem:[%s1209] sm:$0xff]
    %v1211 = vld [vmem:[%s1209 + $0x8] sm:$0xff]
    %v1212 = vld [vmem:[%s1209 + $0x10] sm:$0xff]
    %v1213 = vld [vmem:[%s1209 + $0x18] sm:$0xff]
    %1214 = vmatpush.msra.mxu0 %v110
    %1215 = vmatpush.msra.mxu0 %v106
    %1216 = vmatpush.msra.mxu0 %v102
    %1217 = vmatpush.msra.mxu0 %v98
    %1218 = vmatpush.msra.mxu0 %v94
    %1219 = vmatpush.msra.mxu0 %v90
    %1220 = vmatpush.msra.mxu0 %v86
    %1221 = vmatpush.msra.mxu0 %v82
    %1222 = vmatpush.msra.mxu0 %v78
    %1223 = vmatpush.msra.mxu0 %v74
    %1224 = vmatpush.msra.mxu0 %v70
    %1225 = vmatpush.msra.mxu0 %v66
    %1226 = vmatpush.msra.mxu0 %v62
    %1227 = vmatpush.msra.mxu0 %v58
    %1228 = vmatpush.msra.mxu0 %v54
    %1229 = vmatpush.msra.mxu0 %v50
    %1230 = vmatmul.f32.gmra.mxu0 %v1204
    %v1231 = vpop.f32.mrf.mxu0
    %v1232 = vadd.f32 0.0, %v1231
    %1233 = vdwg.mxu0
    %1234 = vmatpush.msra.mxu0 %v111
    %1235 = vmatpush.msra.mxu0 %v107
    %1236 = vmatpush.msra.mxu0 %v103
    %1237 = vmatpush.msra.mxu0 %v99
    %1238 = vmatpush.msra.mxu0 %v95
    %1239 = vmatpush.msra.mxu0 %v91
    %1240 = vmatpush.msra.mxu0 %v87
    %1241 = vmatpush.msra.mxu0 %v83
    %1242 = vmatpush.msra.mxu0 %v79
    %1243 = vmatpush.msra.mxu0 %v75
    %1244 = vmatpush.msra.mxu0 %v71
    %1245 = vmatpush.msra.mxu0 %v67
    %1246 = vmatpush.msra.mxu0 %v63
    %1247 = vmatpush.msra.mxu0 %v59
    %1248 = vmatpush.msra.mxu0 %v55
    %1249 = vmatpush.msra.mxu0 %v51
    %1250 = vmatmul.f32.gmra.mxu0 %v1204
    %v1251 = vpop.f32.mrf.mxu0
    %v1252 = vadd.f32 0.0, %v1251
    %1253 = vdwg.mxu0
    %1254 = vmatpush.msra.mxu0 %v112
    %1255 = vmatpush.msra.mxu0 %v108
    %1256 = vmatpush.msra.mxu0 %v104
    %1257 = vmatpush.msra.mxu0 %v100
    %1258 = vmatpush.msra.mxu0 %v96
    %1259 = vmatpush.msra.mxu0 %v92
    %1260 = vmatpush.msra.mxu0 %v88
    %1261 = vmatpush.msra.mxu0 %v84
    %1262 = vmatpush.msra.mxu0 %v80
    %1263 = vmatpush.msra.mxu0 %v76
    %1264 = vmatpush.msra.mxu0 %v72
    %1265 = vmatpush.msra.mxu0 %v68
    %1266 = vmatpush.msra.mxu0 %v64
    %1267 = vmatpush.msra.mxu0 %v60
    %1268 = vmatpush.msra.mxu0 %v56
    %1269 = vmatpush.msra.mxu0 %v52
    %1270 = vmatmul.f32.gmra.mxu0 %v1204
    %v1271 = vpop.f32.mrf.mxu0
    %v1272 = vadd.f32 0.0, %v1271
    %1273 = vdwg.mxu0
    %1274 = vmatpush.msra.mxu0 %v113
    %1275 = vmatpush.msra.mxu0 %v109
    %1276 = vmatpush.msra.mxu0 %v105
    %1277 = vmatpush.msra.mxu0 %v101
    %1278 = vmatpush.msra.mxu0 %v97
    %1279 = vmatpush.msra.mxu0 %v93
    %1280 = vmatpush.msra.mxu0 %v89
    %1281 = vmatpush.msra.mxu0 %v85
    %1282 = vmatpush.msra.mxu0 %v81
    %1283 = vmatpush.msra.mxu0 %v77
    %1284 = vmatpush.msra.mxu0 %v73
    %1285 = vmatpush.msra.mxu0 %v69
    %1286 = vmatpush.msra.mxu0 %v65
    %1287 = vmatpush.msra.mxu0 %v61
    %1288 = vmatpush.msra.mxu0 %v57
    %1289 = vmatpush.msra.mxu0 %v53
    %1290 = vmatmul.f32.gmra.mxu0 %v1204
    %v1291 = vpop.f32.mrf.mxu0
    %v1292 = vadd.f32 0.0, %v1291
    %1293 = vdwg.mxu0
    %v1294 = vadd.f32 %v1210, %v1232
    %v1295 = vadd.f32 %v1211, %v1252
    %v1296 = vadd.f32 %v1212, %v1272
    %v1297 = vadd.f32 %v1213, %v1292
    %v1298 = vxor.u32 %v1294, 2147483648
    %v1299 = vxor.u32 %v1295, 2147483648
    %v1300 = vxor.u32 %v1296, 2147483648
    %v1301 = vmul.f32 %v1298, 1.442695
    %v1302 = vpow.pop %v1301
    %v1303 = vmul.f32 %v1299, 1.442695
    %v1304 = vpow.pop %v1303
    %v1305 = vmul.f32 %v1300, 1.442695
    %v1306 = vpow.pop %v1305
    %v1307 = vadd.f32 %v1302, 1.0
    %v1308 = vadd.f32 %v1304, 1.0
    %v1309 = vadd.f32 %v1306, 1.0
    %v1310 = vrcp.pop %v1307
    %v1311 = vmul.f32 %v1307, %v1310
    %v1312 = vsub.f32 1.0, %v1311
    %v1313 = vmul.f32 %v1310, %v1312
    %v1314 = vadd.f32 %v1310, %v1313
    %vm1315 = vweird.f32 %v1307
    %vm1316 = vweird.f32 %v1310
    %vm1317 = vmor %vm1315, %vm1316
    %v1318 = vsel %vm1317, %v1310, %v1314
    %v1319 = vand.u32 2147483647, %v1307
    %vm1320 = vcmp.eq.f32.partialorder %v1319, 8.507059e+37
    %v1321 = vand.u32 %v1307, 2147483648
    %v1322 = vor.u32 1.1754944e-38, %v1321
    %v1323 = vsel %vm1320, %v1322, %v1318
    %v1324 = vmul.f32 1.0, %v1323
    %v1325 = vrcp.pop %v1308
    %v1326 = vmul.f32 %v1308, %v1325
    %v1327 = vsub.f32 1.0, %v1326
    %v1328 = vmul.f32 %v1325, %v1327
    %v1329 = vadd.f32 %v1325, %v1328
    %vm1330 = vweird.f32 %v1308
    %vm1331 = vweird.f32 %v1325
    %vm1332 = vmor %vm1330, %vm1331
    %v1333 = vsel %vm1332, %v1325, %v1329
    %v1334 = vand.u32 2147483647, %v1308
    %vm1335 = vcmp.eq.f32.partialorder %v1334, 8.507059e+37
    %v1336 = vand.u32 %v1308, 2147483648
    %v1337 = vor.u32 1.1754944e-38, %v1336
    %v1338 = vsel %vm1335, %v1337, %v1333
    %v1339 = vmul.f32 1.0, %v1338
    %v1340 = vrcp.pop %v1309
    %v1341 = vmul.f32 %v1309, %v1340
    %v1342 = vsub.f32 1.0, %v1341
    %v1343 = vmul.f32 %v1340, %v1342
    %v1344 = vadd.f32 %v1340, %v1343
    %vm1345 = vweird.f32 %v1309
    %vm1346 = vweird.f32 %v1340
    %vm1347 = vmor %vm1345, %vm1346
    %v1348 = vsel %vm1347, %v1340, %v1344
    %v1349 = vand.u32 2147483647, %v1309
    %vm1350 = vcmp.eq.f32.partialorder %v1349, 8.507059e+37
    %v1351 = vand.u32 %v1309, 2147483648
    %v1352 = vor.u32 1.1754944e-38, %v1351
    %v1353 = vsel %vm1350, %v1352, %v1348
    %v1354 = vmul.f32 1.0, %v1353
    %v1355 = vtanh.pop %v1297
    %v1356 = vmul.f32 %v1339, %v1202
    %v1357 = vmul.f32 %v1324, %v1355
    %v1358 = vadd.f32 %v1356, %v1357
    %v1359 = vtanh.pop %v1358
    %v1360 = vmul.f32 %v1354, %v1359
    %s1361 = scalar_lea.vmem [#allocation9], 56
    %1362 = vst [vmem:[%s1361] sm:$0xff] %v1360
    %1363 = vst [vmem:[#allocation2] sm:$0xff] %v1360
    %1364 = vst [vmem:[#allocation3] sm:$0xff] %v1358
    // Predicated region
    $region22: #{tpu_custom_call.1} parent=1 // pred_check
      _
    $region23: #{tpu_custom_call.1} parent=1 // pred_check_branch
      %1366 = sbr.rel (0) target = $region25
    $region24: #{tpu_custom_call.1} parent=1 // pred_region
      %1368 = vsyncadd [#allocation6], 0
      %s1369 = sshll.u32 [#allocation9], 4
      %s1370 = int_to_ptr.vmem [resolvable:$true] %s1369
      %s1371 = sshll.u32 %s2, 4
      %s1372 = int_to_ptr.hbm [resolvable:$true] %s1371
      %1377 = dma.vmem_to_hbm [thread:$0]  %s1370, 1024, %s1372, [#allocation6], 128, 128, 8
    $region25: #{tpu_custom_call.1} parent=1 // pred_fallthru
      _
    // Predicated region
    $region26: #{tpu_custom_call.1} parent=1 // pred_check
      _
    $region27: #{tpu_custom_call.1} parent=1 // pred_check_branch
      %1379 = sbr.rel (0) target = $region29
    $region28: #{tpu_custom_call.1} parent=1 // pred_region
      %1381 = dma.done [#allocation6], 1024
    $region29: #{tpu_custom_call.1} parent=1 // pred_fallthru
      _
    %1382 = vsyncpa [#allocation5], 1
    %1383 = vsyncpa [#allocation8], 1
    %1384 = vsyncpa [#allocation6], 1

</llo_original>
